<compile_context>
chip_gen: v7x
topology: tpu7x:2x2x1
jax: 0.10.0
libtpu: 0.0.40
codegen_flags: <defaults>
</compile_context>

<pallas_src>
import functools

import jax
import jax.numpy as jnp
from jax import lax
from jax.experimental import pallas as pl
from jax.experimental.pallas import tpu as pltpu

EPS = 1e-5  # nn.InstanceNorm2d default eps


def _round_up(x, m):
    return (x + m - 1) // m * m


def _lane_channel_sum(row, cout):
    """row: (1, W*C) lane-packed. Returns (1, W*C) where every lane holds the
    sum over the W lanes sharing its channel class (lane % C). Any rotation by
    a multiple of C permutes within a channel class, so the rotate-and-add
    tree is direction agnostic."""
    wco = row.shape[-1]
    w = wco // cout
    if w & (w - 1) == 0:                       # power-of-two W: log2(W) rolls
        total = row
        step = cout
        while step < wco:
            total = total + pltpu.roll(total, step, axis=1)
            step *= 2
        return total
    total = row                                # generic fallback: W-1 rolls
    for j in range(1, w):
        total = total + pltpu.roll(row, j * cout, axis=1)
    return total


def _conv_block_kernel(x_ref, m1_ref, b1_ref, m2_ref, b2_ref, o_ref, *,
                       cout, height, use_bf16):
    # x_ref:  (bt*H, Lin)      lane-packed rows (lane = w*Cin + ci, 0-padded to 128k)
    # m1_ref: (3*Lin, W*Cout)  fused banded conv1 weights (kh taps stacked along K)
    # b1_ref: (1, W*Cout)      conv1 bias replicated over w
    # m2_ref: (3*Lmid, W*Cout)
    # b2_ref: (1, W*Cout)
    # o_ref:  (bt*H, W*Cout)   lane-dense output
    M, wco = o_ref.shape
    H = height
    bt = M // H
    W = wco // cout
    inv_hw = 1.0 / (H * W)
    mm_dtype = jnp.bfloat16 if use_bf16 else jnp.float32

    def conv3x3(inp, m_ref, bias_row):
        # 3x3 / stride 1 / pad 1 conv as ONE MXU contraction:
        #   concat_lane([x[r-1], x[r], x[r+1]]) @ vstack([M0, M1, M2])
        # Row shifts run as sublane rolls (XLU) with per-image boundary masks,
        # so no MXU issue slots are spent on degenerate shift matmuls and the
        # rolls never mix rows of adjacent images in the batch tile.
        mr, L = inp.shape
        h_id = lax.broadcasted_iota(jnp.int32, (mr, L), 0) % H
        prev = jnp.where(h_id != 0, pltpu.roll(inp, 1, axis=0), 0.0)         # x[r-1]
        nxt = jnp.where(h_id != H - 1, pltpu.roll(inp, mr - 1, axis=0), 0.0)  # x[r+1]
        cat = jnp.concatenate([prev, inp, nxt], axis=1).astype(mm_dtype)
        acc = jnp.dot(cat, m_ref[...].astype(mm_dtype),
                      preferred_element_type=jnp.float32)
        return acc + bias_row

    x = x_ref[...].astype(jnp.float32)

    # ---- conv1 + bias (lane-packed: lane = w*Cout + co) ----
    y = conv3x3(x, m1_ref, b1_ref[...].astype(jnp.float32))

    # ---- InstanceNorm2d (affine=False): per image in the batch tile.
    #      Two-pass (subtract mean, then square) for numerical robustness. ----
    pieces = []
    for b in range(bt):                        # static unroll; bt is small
        yb = y[b * H:(b + 1) * H, :]           # sublane-aligned static slice
        mean = _lane_channel_sum(jnp.sum(yb, axis=0, keepdims=True),
                                 cout) * inv_hw
        d = yb - mean
        var = _lane_channel_sum(jnp.sum(d * d, axis=0, keepdims=True),
                                cout) * inv_hw
        pieces.append(d * lax.rsqrt(var + EPS))
    y = pieces[0] if bt == 1 else jnp.concatenate(pieces, axis=0)

    # ---- conv2 + bias + ReLU, lane-dense store ----
    lmid = m2_ref.shape[0] // 3
    if lmid != wco:                            # only when W*Cout % 128 != 0
        y = jnp.pad(y, ((0, 0), (0, lmid - wco)))
    y = conv3x3(y, m2_ref, b2_ref[...].astype(jnp.float32))
    o_ref[...] = jnp.maximum(y, 0.0).astype(o_ref.dtype)


def _banded_conv_mats(w_oihw, W):
    """M[kh][wi*Cin+ci, wo*Cout+co] = w[co, ci, kh, wi-wo+1] if |wi-wo|<=1 else 0.
    Applies the three kw taps + channel contraction of a pad=1 3x3 conv to a
    lane-packed (rows, W*Cin) slab in one matmul per kh tap."""
    w_hwio = jnp.transpose(w_oihw, (2, 3, 1, 0)).astype(jnp.float32)  # (3,3,Ci,Co)
    Cin, Cout = w_hwio.shape[2], w_hwio.shape[3]
    wi = jnp.arange(W)[:, None]
    wo = jnp.arange(W)[None, :]
    kw = wi - wo + 1                                     # (W, W)
    valid = (kw >= 0) & (kw <= 2)
    kw_c = jnp.clip(kw, 0, 2)
    mats = []
    for kh in range(3):
        blk = w_hwio[kh][kw_c]                           # (W, W, Cin, Cout)
        blk = jnp.where(valid[:, :, None, None], blk, 0.0)
        mats.append(jnp.transpose(blk, (0, 2, 1, 3)).reshape(W * Cin, W * Cout))
    return jnp.stack(mats, axis=0)                       # (3, W*Cin, W*Cout)


def _fused_conv_mat(w_oihw, W, lane_pad):
    """Stack the three kh-tap banded matrices along K, zero-padding each tap's
    rows to `lane_pad` so the in-kernel lane concat stays 128-aligned."""
    mats = _banded_conv_mats(w_oihw, W)                  # (3, W*Cin, W*Cout)
    wcin = mats.shape[1]
    if lane_pad != wcin:
        mats = jnp.pad(mats, ((0, 0), (0, lane_pad - wcin), (0, 0)))
    return mats.reshape(3 * lane_pad, mats.shape[2])     # (3*lane_pad, W*Cout)


def _pick_batch_tile(n, h):
    """Aim for ~128 MXU rows per grid step while keeping >=2 grid steps
    (megacore / v7x's two TensorCores) and <=256 rows (vreg pressure)."""
    if n < 2:
        return max(n, 1)
    bt = max(1, min(n // 2, max(1, 128 // h)))
    bt = min(bt, max(1, 256 // h))
    while n % bt:
        bt -= 1
    return bt


def conv_block(x_nchw, w1_oihw, b1, w2_oihw, b2, *, batch_tile=None,
               use_bf16=False):
    """ConvBlock forward. x_nchw: (N, Cin, H, W); weights in PyTorch OIHW.
    use_bf16=True casts MXU operands to bf16 (v6e/v7x throughput option)."""
    N, Cin, H, W = x_nchw.shape
    Cout = w1_oihw.shape[0]
    wcin, wco = W * Cin, W * Cout
    lin = _round_up(wcin, 128)
    lmid = _round_up(wco, 128)

    bt = batch_tile if batch_tile is not None else _pick_batch_tile(N, H)
    if N % bt or (bt * H) % 8:
        bt = N                                  # single full-block fallback
    rows = bt * H

    # Lane-packed rows X[n*H + h, w*Cin + ci], zero-padded to a 128-lane multiple.
    # TODO(synk): accept NHWC I/O to drop the two wrapper transposes over HBM.
    x_rows = jnp.transpose(x_nchw, (0, 2, 3, 1)).reshape(N * H, wcin)
    if lin != wcin:
        x_rows = jnp.pad(x_rows, ((0, 0), (0, lin - wcin)))

    m1 = _fused_conv_mat(w1_oihw, W, lin)        # (3*lin,  W*Cout)
    m2 = _fused_conv_mat(w2_oihw, W, lmid)       # (3*lmid, W*Cout)
    b1_row = jnp.tile(b1.astype(jnp.float32), W).reshape(1, wco)
    b2_row = jnp.tile(b2.astype(jnp.float32), W).reshape(1, wco)

    cost = pl.CostEstimate(
        flops=2 * N * H * wco * 3 * (lin + lmid),
        transcendentals=N * Cout,
        bytes_accessed=4 * (N * H * (lin + wco) + 3 * (lin + lmid) * wco + 2 * wco),
    )

    out_rows = pl.pallas_call(
        functools.partial(_conv_block_kernel, cout=Cout, height=H,
                          use_bf16=use_bf16),
        out_shape=jax.ShapeDtypeStruct((N * H, wco), x_nchw.dtype),
        grid_spec=pltpu.PrefetchScalarGridSpec(
            num_scalar_prefetch=0,
            grid=(N // bt,),
            in_specs=[
                pl.BlockSpec((rows, lin), lambda n: (n, 0)),
                # Constant block index: weights/biases DMA'd once, VMEM-resident.
                pl.BlockSpec((3 * lin, wco), lambda n: (0, 0)),
                pl.BlockSpec((1, wco), lambda n: (0, 0)),
                pl.BlockSpec((3 * lmid, wco), lambda n: (0, 0)),
                pl.BlockSpec((1, wco), lambda n: (0, 0)),
            ],
            out_specs=pl.BlockSpec((rows, wco), lambda n: (n, 0)),
        ),
        compiler_params=pltpu.CompilerParams(
            dimension_semantics=("parallel",),
            vmem_limit_bytes=48 * 1024 * 1024),
        cost_estimate=cost,
    )(x_rows, m1, b1_row, m2, b2_row)

    # (N*H, W*Cout) -> (N, Cout, H, W)
    return jnp.transpose(out_rows.reshape(N, H, W, Cout), (0, 3, 1, 2))


def ref_forward(x_nchw, w1_oihw, b1, w2_oihw, b2):
    """Pure-JAX reference matching PyTorch ConvBlock semantics."""
    dn = ("NCHW", "OIHW", "NCHW")
    y = lax.conv_general_dilated(x_nchw, w1_oihw, (1, 1), ((1, 1), (1, 1)),
                                 dimension_numbers=dn)
    y = y + b1[None, :, None, None]
    mean = jnp.mean(y, axis=(2, 3), keepdims=True)
    var = jnp.var(y, axis=(2, 3), keepdims=True)          # biased
    y = (y - mean) * lax.rsqrt(var + EPS)
    y = lax.conv_general_dilated(y, w2_oihw, (1, 1), ((1, 1), (1, 1)),
                                 dimension_numbers=dn)
    y = y + b2[None, :, None, None]
    return jnp.maximum(y, 0.0)


if __name__ == "__main__":
    configs = [
        # (N, Cin, Cout, H, W)
        (8, 4, 8, 16, 16),   # batch-tiled: 2 grid steps x 4 images (M = 64 rows)
        (2, 3, 8, 16, 16),   # lane-padded Cin (48 -> 128 lanes), batch tile of 1
    ]
    for (N, Cin, Cout, H, W) in configs:
        key = jax.random.PRNGKey(0)
        k1, k2, k3, k4, k5 = jax.random.split(key, 5)

        x = jax.random.normal(k1, (N, Cin, H, W), jnp.float32)
        w1 = jax.random.normal(k2, (Cout, Cin, 3, 3), jnp.float32) / (Cin * 9) ** 0.5
        b1 = jax.random.normal(k3, (Cout,), jnp.float32) * 0.1
        w2 = jax.random.normal(k4, (Cout, Cout, 3, 3), jnp.float32) / (Cout * 9) ** 0.5
        b2 = jax.random.normal(k5, (Cout,), jnp.float32) * 0.1

        out = jax.block_until_ready(conv_block(x, w1, b1, w2, b2))
        ref = jax.block_until_ready(ref_forward(x, w1, b1, w2, b2))

        assert out.shape == (N, Cout, H, W), out.shape
        assert jnp.allclose(out, ref, atol=1e-4, rtol=1e-4), \
            float(jnp.max(jnp.abs(out - ref)))
    print("KERNEL_OK")
</pallas_src>

<mosaic_0001>
module attributes {stable_mosaic.version = 11 : i64} {
  func.func @_conv_block_kernel(%arg0: i32, %arg1: memref<64x128xf32, #tpu.memory_space<vmem>>, %arg2: memref<384x128xf32, #tpu.memory_space<vmem>>, %arg3: memref<1x128xf32, #tpu.memory_space<vmem>>, %arg4: memref<384x128xf32, #tpu.memory_space<vmem>>, %arg5: memref<1x128xf32, #tpu.memory_space<vmem>>, %arg6: memref<64x128xf32, #tpu.memory_space<vmem>>) attributes {dimension_semantics = [#tpu.dimension_semantics<parallel>], iteration_bounds = array<i64: 2>, scalar_prefetch = 0 : i64, scratch_operands = 0 : i64, tpu.core_type = #tpu.core_type<tc>, window_params = [{transform_indices = @transform_0, window_bounds = array<i64: 64, 128>}, {pipeline_mode = #tpu.pipeline_mode<synchronous>, transform_indices = @transform_1, window_bounds = array<i64: 384, 128>}, {pipeline_mode = #tpu.pipeline_mode<synchronous>, transform_indices = @transform_2, window_bounds = array<i64: 1, 128>}, {pipeline_mode = #tpu.pipeline_mode<synchronous>, transform_indices = @transform_3, window_bounds = array<i64: 384, 128>}, {pipeline_mode = #tpu.pipeline_mode<synchronous>, transform_indices = @transform_4, window_bounds = array<i64: 1, 128>}, {transform_indices = @transform_5, window_bounds = array<i64: 64, 128>}]} {
    %c0 = arith.constant 0 : index
    %c0_0 = arith.constant 0 : index
    %0 = vector.load %arg1[%c0, %c0_0] : memref<64x128xf32, #tpu.memory_space<vmem>>, vector<64x128xf32>
    %c0_1 = arith.constant 0 : index
    %c0_2 = arith.constant 0 : index
    %1 = vector.load %arg3[%c0_1, %c0_2] : memref<1x128xf32, #tpu.memory_space<vmem>>, vector<1x128xf32>
    %2 = tpu.iota {dimensions = array<i32: 0>} : vector<64x128xi32>
    %c16_i32 = arith.constant 16 : i32
    %c0_i32 = arith.constant 0 : i32
    %3 = arith.cmpi eq, %c16_i32, %c0_i32 : i32
    %c1_i32 = arith.constant 1 : i32
    %4 = arith.select %3, %c1_i32, %c16_i32 : i32
    %5 = vector.broadcast %4 : i32 to vector<64x128xi32>
    %6 = arith.remsi %2, %5 : vector<64x128xi32>
    %c0_i32_3 = arith.constant 0 : i32
    %7 = vector.broadcast %c0_i32_3 : i32 to vector<64x128xi32>
    %8 = arith.cmpi ne, %6, %7 : vector<64x128xi32>
    %c0_i32_4 = arith.constant 0 : i32
    %9 = vector.broadcast %c0_i32_4 : i32 to vector<64x128xi32>
    %10 = arith.cmpi slt, %6, %9 : vector<64x128xi32>
    %c0_i32_5 = arith.constant 0 : i32
    %11 = arith.cmpi slt, %4, %c0_i32_5 : i32
    %12 = vector.broadcast %11 : i1 to vector<64x128xi1>
    %13 = vector.broadcast %12 : vector<64x128xi1> to vector<64x128xi1>
    %14 = arith.xori %10, %13 : vector<64x128xi1>
    %15 = arith.andi %14, %8 : vector<64x128xi1>
    %16 = vector.broadcast %4 : i32 to vector<64x128xi32>
    %17 = arith.addi %6, %16 : vector<64x128xi32>
    %18 = arith.select %15, %17, %6 : vector<64x128xi1>, vector<64x128xi32>
    %c0_i32_6 = arith.constant 0 : i32
    %19 = vector.broadcast %c0_i32_6 : i32 to vector<64x128xi32>
    %20 = arith.cmpi ne, %18, %19 : vector<64x128xi32>
    %c1_i32_7 = arith.constant 1 : i32
    %21 = tpu.dynamic_rotate %0 by %c1_i32_7 dim 0 : vector<64x128xf32>, i32 -> vector<64x128xf32>
    %cst = arith.constant 0.000000e+00 : f32
    %22 = vector.broadcast %cst : f32 to vector<64x128xf32>
    %23 = arith.select %20, %21, %22 : vector<64x128xi1>, vector<64x128xf32>
    %c15_i32 = arith.constant 15 : i32
    %24 = vector.broadcast %c15_i32 : i32 to vector<64x128xi32>
    %25 = arith.cmpi ne, %18, %24 : vector<64x128xi32>
    %c63_i32 = arith.constant 63 : i32
    %26 = tpu.dynamic_rotate %0 by %c63_i32 dim 0 : vector<64x128xf32>, i32 -> vector<64x128xf32>
    %cst_8 = arith.constant 0.000000e+00 : f32
    %27 = vector.broadcast %cst_8 : f32 to vector<64x128xf32>
    %28 = arith.select %25, %26, %27 : vector<64x128xi1>, vector<64x128xf32>
    %29 = tpu.concatenate %23, %0, %28 in 1 : vector<64x128xf32>, vector<64x128xf32>, vector<64x128xf32> -> vector<64x384xf32>
    %c0_9 = arith.constant 0 : index
    %c0_10 = arith.constant 0 : index
    %30 = vector.load %arg2[%c0_9, %c0_10] : memref<384x128xf32, #tpu.memory_space<vmem>>, vector<384x128xf32>
    %cst_11 = arith.constant dense<0.000000e+00> : vector<64x128xf32>
    %31 = tpu.matmul %29, %30, %cst_11 {dimension_numbers = #tpu.dot_dimension_numbers<[1], [0], [0], [1], [0, 0, 1, 1], [], []>} : vector<64x384xf32>, vector<384x128xf32>, vector<64x128xf32> -> vector<64x128xf32>
    %32 = vector.broadcast %1 : vector<1x128xf32> to vector<64x128xf32>
    %33 = arith.addf %31, %32 : vector<64x128xf32>
    %34 = vector.extract_strided_slice %33 {offsets = [0, 0], sizes = [16, 128], strides = [1, 1]} : vector<64x128xf32> to vector<16x128xf32>
    %cst_12 = arith.constant dense<0.000000e+00> : vector<128xf32>
    %35 = vector.multi_reduction <add>, %34, %cst_12 [0] : vector<16x128xf32> to vector<128xf32>
    %36 = vector.shape_cast %35 : vector<128xf32> to vector<1x128xf32>
    %c8_i32 = arith.constant 8 : i32
    %37 = tpu.dynamic_rotate %36 by %c8_i32 dim 1 : vector<1x128xf32>, i32 -> vector<1x128xf32>
    %38 = arith.addf %36, %37 : vector<1x128xf32>
    %c16_i32_13 = arith.constant 16 : i32
    %39 = tpu.dynamic_rotate %38 by %c16_i32_13 dim 1 : vector<1x128xf32>, i32 -> vector<1x128xf32>
    %40 = arith.addf %38, %39 : vector<1x128xf32>
    %c32_i32 = arith.constant 32 : i32
    %41 = tpu.dynamic_rotate %40 by %c32_i32 dim 1 : vector<1x128xf32>, i32 -> vector<1x128xf32>
    %42 = arith.addf %40, %41 : vector<1x128xf32>
    %c64_i32 = arith.constant 64 : i32
    %43 = tpu.dynamic_rotate %42 by %c64_i32 dim 1 : vector<1x128xf32>, i32 -> vector<1x128xf32>
    %44 = arith.addf %42, %43 : vector<1x128xf32>
    %cst_14 = arith.constant 3.906250e-03 : f32
    %45 = vector.broadcast %cst_14 : f32 to vector<1x128xf32>
    %46 = arith.mulf %44, %45 : vector<1x128xf32>
    %47 = vector.broadcast %46 : vector<1x128xf32> to vector<16x128xf32>
    %48 = arith.subf %34, %47 : vector<16x128xf32>
    %49 = arith.mulf %48, %48 : vector<16x128xf32>
    %cst_15 = arith.constant dense<0.000000e+00> : vector<128xf32>
    %50 = vector.multi_reduction <add>, %49, %cst_15 [0] : vector<16x128xf32> to vector<128xf32>
    %51 = vector.shape_cast %50 : vector<128xf32> to vector<1x128xf32>
    %c8_i32_16 = arith.constant 8 : i32
    %52 = tpu.dynamic_rotate %51 by %c8_i32_16 dim 1 : vector<1x128xf32>, i32 -> vector<1x128xf32>
    %53 = arith.addf %51, %52 : vector<1x128xf32>
    %c16_i32_17 = arith.constant 16 : i32
    %54 = tpu.dynamic_rotate %53 by %c16_i32_17 dim 1 : vector<1x128xf32>, i32 -> vector<1x128xf32>
    %55 = arith.addf %53, %54 : vector<1x128xf32>
    %c32_i32_18 = arith.constant 32 : i32
    %56 = tpu.dynamic_rotate %55 by %c32_i32_18 dim 1 : vector<1x128xf32>, i32 -> vector<1x128xf32>
    %57 = arith.addf %55, %56 : vector<1x128xf32>
    %c64_i32_19 = arith.constant 64 : i32
    %58 = tpu.dynamic_rotate %57 by %c64_i32_19 dim 1 : vector<1x128xf32>, i32 -> vector<1x128xf32>
    %59 = arith.addf %57, %58 : vector<1x128xf32>
    %cst_20 = arith.constant 3.906250e-03 : f32
    %60 = vector.broadcast %cst_20 : f32 to vector<1x128xf32>
    %61 = arith.mulf %59, %60 : vector<1x128xf32>
    %cst_21 = arith.constant 9.99999974E-6 : f32
    %62 = vector.broadcast %cst_21 : f32 to vector<1x128xf32>
    %63 = arith.addf %61, %62 : vector<1x128xf32>
    %64 = math.rsqrt %63 : vector<1x128xf32>
    %65 = vector.broadcast %64 : vector<1x128xf32> to vector<16x128xf32>
    %66 = arith.mulf %48, %65 : vector<16x128xf32>
    %67 = vector.extract_strided_slice %33 {offsets = [16, 0], sizes = [16, 128], strides = [1, 1]} : vector<64x128xf32> to vector<16x128xf32>
    %cst_22 = arith.constant dense<0.000000e+00> : vector<128xf32>
    %68 = vector.multi_reduction <add>, %67, %cst_22 [0] : vector<16x128xf32> to vector<128xf32>
    %69 = vector.shape_cast %68 : vector<128xf32> to vector<1x128xf32>
    %c8_i32_23 = arith.constant 8 : i32
    %70 = tpu.dynamic_rotate %69 by %c8_i32_23 dim 1 : vector<1x128xf32>, i32 -> vector<1x128xf32>
    %71 = arith.addf %69, %70 : vector<1x128xf32>
    %c16_i32_24 = arith.constant 16 : i32
    %72 = tpu.dynamic_rotate %71 by %c16_i32_24 dim 1 : vector<1x128xf32>, i32 -> vector<1x128xf32>
    %73 = arith.addf %71, %72 : vector<1x128xf32>
    %c32_i32_25 = arith.constant 32 : i32
    %74 = tpu.dynamic_rotate %73 by %c32_i32_25 dim 1 : vector<1x128xf32>, i32 -> vector<1x128xf32>
    %75 = arith.addf %73, %74 : vector<1x128xf32>
    %c64_i32_26 = arith.constant 64 : i32
    %76 = tpu.dynamic_rotate %75 by %c64_i32_26 dim 1 : vector<1x128xf32>, i32 -> vector<1x128xf32>
    %77 = arith.addf %75, %76 : vector<1x128xf32>
    %cst_27 = arith.constant 3.906250e-03 : f32
    %78 = vector.broadcast %cst_27 : f32 to vector<1x128xf32>
    %79 = arith.mulf %77, %78 : vector<1x128xf32>
    %80 = vector.broadcast %79 : vector<1x128xf32> to vector<16x128xf32>
    %81 = arith.subf %67, %80 : vector<16x128xf32>
    %82 = arith.mulf %81, %81 : vector<16x128xf32>
    %cst_28 = arith.constant dense<0.000000e+00> : vector<128xf32>
    %83 = vector.multi_reduction <add>, %82, %cst_28 [0] : vector<16x128xf32> to vector<128xf32>
    %84 = vector.shape_cast %83 : vector<128xf32> to vector<1x128xf32>
    %c8_i32_29 = arith.constant 8 : i32
    %85 = tpu.dynamic_rotate %84 by %c8_i32_29 dim 1 : vector<1x128xf32>, i32 -> vector<1x128xf32>
    %86 = arith.addf %84, %85 : vector<1x128xf32>
    %c16_i32_30 = arith.constant 16 : i32
    %87 = tpu.dynamic_rotate %86 by %c16_i32_30 dim 1 : vector<1x128xf32>, i32 -> vector<1x128xf32>
    %88 = arith.addf %86, %87 : vector<1x128xf32>
    %c32_i32_31 = arith.constant 32 : i32
    %89 = tpu.dynamic_rotate %88 by %c32_i32_31 dim 1 : vector<1x128xf32>, i32 -> vector<1x128xf32>
    %90 = arith.addf %88, %89 : vector<1x128xf32>
    %c64_i32_32 = arith.constant 64 : i32
    %91 = tpu.dynamic_rotate %90 by %c64_i32_32 dim 1 : vector<1x128xf32>, i32 -> vector<1x128xf32>
    %92 = arith.addf %90, %91 : vector<1x128xf32>
    %cst_33 = arith.constant 3.906250e-03 : f32
    %93 = vector.broadcast %cst_33 : f32 to vector<1x128xf32>
    %94 = arith.mulf %92, %93 : vector<1x128xf32>
    %cst_34 = arith.constant 9.99999974E-6 : f32
    %95 = vector.broadcast %cst_34 : f32 to vector<1x128xf32>
    %96 = arith.addf %94, %95 : vector<1x128xf32>
    %97 = math.rsqrt %96 : vector<1x128xf32>
    %98 = vector.broadcast %97 : vector<1x128xf32> to vector<16x128xf32>
    %99 = arith.mulf %81, %98 : vector<16x128xf32>
    %100 = vector.extract_strided_slice %33 {offsets = [32, 0], sizes = [16, 128], strides = [1, 1]} : vector<64x128xf32> to vector<16x128xf32>
    %cst_35 = arith.constant dense<0.000000e+00> : vector<128xf32>
    %101 = vector.multi_reduction <add>, %100, %cst_35 [0] : vector<16x128xf32> to vector<128xf32>
    %102 = vector.shape_cast %101 : vector<128xf32> to vector<1x128xf32>
    %c8_i32_36 = arith.constant 8 : i32
    %103 = tpu.dynamic_rotate %102 by %c8_i32_36 dim 1 : vector<1x128xf32>, i32 -> vector<1x128xf32>
    %104 = arith.addf %102, %103 : vector<1x128xf32>
    %c16_i32_37 = arith.constant 16 : i32
    %105 = tpu.dynamic_rotate %104 by %c16_i32_37 dim 1 : vector<1x128xf32>, i32 -> vector<1x128xf32>
    %106 = arith.addf %104, %105 : vector<1x128xf32>
    %c32_i32_38 = arith.constant 32 : i32
    %107 = tpu.dynamic_rotate %106 by %c32_i32_38 dim 1 : vector<1x128xf32>, i32 -> vector<1x128xf32>
    %108 = arith.addf %106, %107 : vector<1x128xf32>
    %c64_i32_39 = arith.constant 64 : i32
    %109 = tpu.dynamic_rotate %108 by %c64_i32_39 dim 1 : vector<1x128xf32>, i32 -> vector<1x128xf32>
    %110 = arith.addf %108, %109 : vector<1x128xf32>
    %cst_40 = arith.constant 3.906250e-03 : f32
    %111 = vector.broadcast %cst_40 : f32 to vector<1x128xf32>
    %112 = arith.mulf %110, %111 : vector<1x128xf32>
    %113 = vector.broadcast %112 : vector<1x128xf32> to vector<16x128xf32>
    %114 = arith.subf %100, %113 : vector<16x128xf32>
    %115 = arith.mulf %114, %114 : vector<16x128xf32>
    %cst_41 = arith.constant dense<0.000000e+00> : vector<128xf32>
    %116 = vector.multi_reduction <add>, %115, %cst_41 [0] : vector<16x128xf32> to vector<128xf32>
    %117 = vector.shape_cast %116 : vector<128xf32> to vector<1x128xf32>
    %c8_i32_42 = arith.constant 8 : i32
    %118 = tpu.dynamic_rotate %117 by %c8_i32_42 dim 1 : vector<1x128xf32>, i32 -> vector<1x128xf32>
    %119 = arith.addf %117, %118 : vector<1x128xf32>
    %c16_i32_43 = arith.constant 16 : i32
    %120 = tpu.dynamic_rotate %119 by %c16_i32_43 dim 1 : vector<1x128xf32>, i32 -> vector<1x128xf32>
    %121 = arith.addf %119, %120 : vector<1x128xf32>
    %c32_i32_44 = arith.constant 32 : i32
    %122 = tpu.dynamic_rotate %121 by %c32_i32_44 dim 1 : vector<1x128xf32>, i32 -> vector<1x128xf32>
    %123 = arith.addf %121, %122 : vector<1x128xf32>
    %c64_i32_45 = arith.constant 64 : i32
    %124 = tpu.dynamic_rotate %123 by %c64_i32_45 dim 1 : vector<1x128xf32>, i32 -> vector<1x128xf32>
    %125 = arith.addf %123, %124 : vector<1x128xf32>
    %cst_46 = arith.constant 3.906250e-03 : f32
    %126 = vector.broadcast %cst_46 : f32 to vector<1x128xf32>
    %127 = arith.mulf %125, %126 : vector<1x128xf32>
    %cst_47 = arith.constant 9.99999974E-6 : f32
    %128 = vector.broadcast %cst_47 : f32 to vector<1x128xf32>
    %129 = arith.addf %127, %128 : vector<1x128xf32>
    %130 = math.rsqrt %129 : vector<1x128xf32>
    %131 = vector.broadcast %130 : vector<1x128xf32> to vector<16x128xf32>
    %132 = arith.mulf %114, %131 : vector<16x128xf32>
    %133 = vector.extract_strided_slice %33 {offsets = [48, 0], sizes = [16, 128], strides = [1, 1]} : vector<64x128xf32> to vector<16x128xf32>
    %cst_48 = arith.constant dense<0.000000e+00> : vector<128xf32>
    %134 = vector.multi_reduction <add>, %133, %cst_48 [0] : vector<16x128xf32> to vector<128xf32>
    %135 = vector.shape_cast %134 : vector<128xf32> to vector<1x128xf32>
    %c8_i32_49 = arith.constant 8 : i32
    %136 = tpu.dynamic_rotate %135 by %c8_i32_49 dim 1 : vector<1x128xf32>, i32 -> vector<1x128xf32>
    %137 = arith.addf %135, %136 : vector<1x128xf32>
    %c16_i32_50 = arith.constant 16 : i32
    %138 = tpu.dynamic_rotate %137 by %c16_i32_50 dim 1 : vector<1x128xf32>, i32 -> vector<1x128xf32>
    %139 = arith.addf %137, %138 : vector<1x128xf32>
    %c32_i32_51 = arith.constant 32 : i32
    %140 = tpu.dynamic_rotate %139 by %c32_i32_51 dim 1 : vector<1x128xf32>, i32 -> vector<1x128xf32>
    %141 = arith.addf %139, %140 : vector<1x128xf32>
    %c64_i32_52 = arith.constant 64 : i32
    %142 = tpu.dynamic_rotate %141 by %c64_i32_52 dim 1 : vector<1x128xf32>, i32 -> vector<1x128xf32>
    %143 = arith.addf %141, %142 : vector<1x128xf32>
    %cst_53 = arith.constant 3.906250e-03 : f32
    %144 = vector.broadcast %cst_53 : f32 to vector<1x128xf32>
    %145 = arith.mulf %143, %144 : vector<1x128xf32>
    %146 = vector.broadcast %145 : vector<1x128xf32> to vector<16x128xf32>
    %147 = arith.subf %133, %146 : vector<16x128xf32>
    %148 = arith.mulf %147, %147 : vector<16x128xf32>
    %cst_54 = arith.constant dense<0.000000e+00> : vector<128xf32>
    %149 = vector.multi_reduction <add>, %148, %cst_54 [0] : vector<16x128xf32> to vector<128xf32>
    %150 = vector.shape_cast %149 : vector<128xf32> to vector<1x128xf32>
    %c8_i32_55 = arith.constant 8 : i32
    %151 = tpu.dynamic_rotate %150 by %c8_i32_55 dim 1 : vector<1x128xf32>, i32 -> vector<1x128xf32>
    %152 = arith.addf %150, %151 : vector<1x128xf32>
    %c16_i32_56 = arith.constant 16 : i32
    %153 = tpu.dynamic_rotate %152 by %c16_i32_56 dim 1 : vector<1x128xf32>, i32 -> vector<1x128xf32>
    %154 = arith.addf %152, %153 : vector<1x128xf32>
    %c32_i32_57 = arith.constant 32 : i32
    %155 = tpu.dynamic_rotate %154 by %c32_i32_57 dim 1 : vector<1x128xf32>, i32 -> vector<1x128xf32>
    %156 = arith.addf %154, %155 : vector<1x128xf32>
    %c64_i32_58 = arith.constant 64 : i32
    %157 = tpu.dynamic_rotate %156 by %c64_i32_58 dim 1 : vector<1x128xf32>, i32 -> vector<1x128xf32>
    %158 = arith.addf %156, %157 : vector<1x128xf32>
    %cst_59 = arith.constant 3.906250e-03 : f32
    %159 = vector.broadcast %cst_59 : f32 to vector<1x128xf32>
    %160 = arith.mulf %158, %159 : vector<1x128xf32>
    %cst_60 = arith.constant 9.99999974E-6 : f32
    %161 = vector.broadcast %cst_60 : f32 to vector<1x128xf32>
    %162 = arith.addf %160, %161 : vector<1x128xf32>
    %163 = math.rsqrt %162 : vector<1x128xf32>
    %164 = vector.broadcast %163 : vector<1x128xf32> to vector<16x128xf32>
    %165 = arith.mulf %147, %164 : vector<16x128xf32>
    %166 = tpu.concatenate %66, %99, %132, %165 in 0 : vector<16x128xf32>, vector<16x128xf32>, vector<16x128xf32>, vector<16x128xf32> -> vector<64x128xf32>
    %c0_61 = arith.constant 0 : index
    %c0_62 = arith.constant 0 : index
    %167 = vector.load %arg5[%c0_61, %c0_62] : memref<1x128xf32, #tpu.memory_space<vmem>>, vector<1x128xf32>
    %168 = tpu.iota {dimensions = array<i32: 0>} : vector<64x128xi32>
    %c16_i32_63 = arith.constant 16 : i32
    %c0_i32_64 = arith.constant 0 : i32
    %169 = arith.cmpi eq, %c16_i32_63, %c0_i32_64 : i32
    %c1_i32_65 = arith.constant 1 : i32
    %170 = arith.select %169, %c1_i32_65, %c16_i32_63 : i32
    %171 = vector.broadcast %170 : i32 to vector<64x128xi32>
    %172 = arith.remsi %168, %171 : vector<64x128xi32>
    %c0_i32_66 = arith.constant 0 : i32
    %173 = vector.broadcast %c0_i32_66 : i32 to vector<64x128xi32>
    %174 = arith.cmpi ne, %172, %173 : vector<64x128xi32>
    %c0_i32_67 = arith.constant 0 : i32
    %175 = vector.broadcast %c0_i32_67 : i32 to vector<64x128xi32>
    %176 = arith.cmpi slt, %172, %175 : vector<64x128xi32>
    %c0_i32_68 = arith.constant 0 : i32
    %177 = arith.cmpi slt, %170, %c0_i32_68 : i32
    %178 = vector.broadcast %177 : i1 to vector<64x128xi1>
    %179 = vector.broadcast %178 : vector<64x128xi1> to vector<64x128xi1>
    %180 = arith.xori %176, %179 : vector<64x128xi1>
    %181 = arith.andi %180, %174 : vector<64x128xi1>
    %182 = vector.broadcast %170 : i32 to vector<64x128xi32>
    %183 = arith.addi %172, %182 : vector<64x128xi32>
    %184 = arith.select %181, %183, %172 : vector<64x128xi1>, vector<64x128xi32>
    %c0_i32_69 = arith.constant 0 : i32
    %185 = vector.broadcast %c0_i32_69 : i32 to vector<64x128xi32>
    %186 = arith.cmpi ne, %184, %185 : vector<64x128xi32>
    %c1_i32_70 = arith.constant 1 : i32
    %187 = tpu.dynamic_rotate %166 by %c1_i32_70 dim 0 : vector<64x128xf32>, i32 -> vector<64x128xf32>
    %cst_71 = arith.constant 0.000000e+00 : f32
    %188 = vector.broadcast %cst_71 : f32 to vector<64x128xf32>
    %189 = arith.select %186, %187, %188 : vector<64x128xi1>, vector<64x128xf32>
    %c15_i32_72 = arith.constant 15 : i32
    %190 = vector.broadcast %c15_i32_72 : i32 to vector<64x128xi32>
    %191 = arith.cmpi ne, %184, %190 : vector<64x128xi32>
    %c63_i32_73 = arith.constant 63 : i32
    %192 = tpu.dynamic_rotate %166 by %c63_i32_73 dim 0 : vector<64x128xf32>, i32 -> vector<64x128xf32>
    %cst_74 = arith.constant 0.000000e+00 : f32
    %193 = vector.broadcast %cst_74 : f32 to vector<64x128xf32>
    %194 = arith.select %191, %192, %193 : vector<64x128xi1>, vector<64x128xf32>
    %195 = tpu.concatenate %189, %166, %194 in 1 : vector<64x128xf32>, vector<64x128xf32>, vector<64x128xf32> -> vector<64x384xf32>
    %c0_75 = arith.constant 0 : index
    %c0_76 = arith.constant 0 : index
    %196 = vector.load %arg4[%c0_75, %c0_76] : memref<384x128xf32, #tpu.memory_space<vmem>>, vector<384x128xf32>
    %cst_77 = arith.constant dense<0.000000e+00> : vector<64x128xf32>
    %197 = tpu.matmul %195, %196, %cst_77 {dimension_numbers = #tpu.dot_dimension_numbers<[1], [0], [0], [1], [0, 0, 1, 1], [], []>} : vector<64x384xf32>, vector<384x128xf32>, vector<64x128xf32> -> vector<64x128xf32>
    %198 = vector.broadcast %167 : vector<1x128xf32> to vector<64x128xf32>
    %199 = arith.addf %197, %198 : vector<64x128xf32>
    %cst_78 = arith.constant 0.000000e+00 : f32
    %200 = vector.broadcast %cst_78 : f32 to vector<64x128xf32>
    %201 = arith.maximumf %199, %200 : vector<64x128xf32>
    %c0_79 = arith.constant 0 : index
    %c0_80 = arith.constant 0 : index
    %202 = vector.load %arg6[%c0_79, %c0_80] : memref<64x128xf32, #tpu.memory_space<vmem>>, vector<64x128xf32>
    tpu.vector_store %arg6[%c0_79, %c0_80], %201 {strides = array<i32>} : memref<64x128xf32, #tpu.memory_space<vmem>>, vector<64x128xf32>,
    return
  }
  func.func @transform_0(%arg0: i32) -> (i32, i32) {
    %c0_i32 = arith.constant 0 : i32
    %c0_i32_0 = arith.constant 0 : i32
    return %arg0, %c0_i32 : i32, i32
  }
  func.func @transform_1(%arg0: i32) -> (i32, i32) {
    %c0_i32 = arith.constant 0 : i32
    %c0_i32_0 = arith.constant 0 : i32
    %c0_i32_1 = arith.constant 0 : i32
    return %c0_i32, %c0_i32_0 : i32, i32
  }
  func.func @transform_2(%arg0: i32) -> (i32, i32) {
    %c0_i32 = arith.constant 0 : i32
    %c0_i32_0 = arith.constant 0 : i32
    %c0_i32_1 = arith.constant 0 : i32
    return %c0_i32, %c0_i32_0 : i32, i32
  }
  func.func @transform_3(%arg0: i32) -> (i32, i32) {
    %c0_i32 = arith.constant 0 : i32
    %c0_i32_0 = arith.constant 0 : i32
    %c0_i32_1 = arith.constant 0 : i32
    return %c0_i32, %c0_i32_0 : i32, i32
  }
  func.func @transform_4(%arg0: i32) -> (i32, i32) {
    %c0_i32 = arith.constant 0 : i32
    %c0_i32_0 = arith.constant 0 : i32
    %c0_i32_1 = arith.constant 0 : i32
    return %c0_i32, %c0_i32_0 : i32, i32
  }
  func.func @transform_5(%arg0: i32) -> (i32, i32) {
    %c0_i32 = arith.constant 0 : i32
    %c0_i32_0 = arith.constant 0 : i32
    return %arg0, %c0_i32 : i32, i32
  }
}

</mosaic_0001>

<llo_original>
// kernel: tpu_custom_call.1
$region0: #{tpu_custom_call.1}
  #allocation0 [shape = 'u32[]', space=smem, size = 0x4, offset = 0x4, fixed_abs, tag = 'smem constant byte address 0x4 - core index']
  #allocation1 [shape = 'u32[144,128]{1,0:T(1,128)}', space=vmem, size = 0x12000, scoped, tag = 'internal scratch']
  %s0 = inlined_call_operand.hbm [shape: f32[128,128], index: 0, kind: input, shape index: {}]
  %s1 = inlined_call_operand.hbm [shape: f32[384,128], index: 1, kind: input, shape index: {}]
  %s2 = inlined_call_operand.vmem [shape: f32[1,128], index: 2, kind: input, shape index: {}]
  %s3 = inlined_call_operand.hbm [shape: f32[384,128], index: 3, kind: input, shape index: {}]
  %s4 = inlined_call_operand.vmem [shape: f32[1,128], index: 4, kind: input, shape index: {}]
  %s5 = inlined_call_operand.hbm [shape: f32[128,128], index: 5, kind: output, shape index: {}]
  %s6 = sld [smem:[#allocation0]]
  $region65: #{tpu_custom_call.1} parent=0
    _
  %s8 = ssub.s32 1, %s6
  %s9 = scalar_select 0, %s8, %s6
  $region1: #{tpu_custom_call.1} parent=0
    #allocation2 [shape = 'u8[65536]{0}', space=vmem, size = 0x10000, scoped, tag = 'input window, operand 0']
    #allocation3 [shape = 's32[2]{0}', space=sflag, size = 0x8, scoped, tag = 'scoped memory for tpu_custom_call.1']
    #allocation4 [shape = 's32[2]{0}', space=sflag, size = 0x8, scoped, tag = 'scoped memory for tpu_custom_call.1']
    #allocation5 [shape = 'u8[196608]{0}', space=vmem, size = 0x30000, scoped, tag = 'input window, operand 1, single buffered']
    #allocation6 [shape = 's32[1]{0}', space=sflag, size = 0x4, scoped, tag = 'scoped memory for tpu_custom_call.1']
    #allocation7 [shape = 'u8[196608]{0}', space=vmem, size = 0x30000, scoped, tag = 'input window, operand 3, single buffered']
    #allocation8 [shape = 'u8[65536]{0}', space=vmem, size = 0x10000, scoped, tag = 'output window, operand 0']
    %10 = vsyncpa [#allocation3], 0
    %s11 = scalar_lea.sflag [#allocation3], 1
    %12 = vsyncpa %s11, 0
    %13 = vsyncpa [#allocation6], 0
    %14 = vsyncpa [#allocation4], 0
    %s15 = scalar_lea.sflag [#allocation4], 1
    %16 = vsyncpa %s15, 0
    loop: start=0, step=1, limit=4
    $region2: #{tpu_custom_call.1} parent=1 // loop_pre_header
      _
    $region3: #{tpu_custom_call.1} parent=1 // loop_header
      %s18 = sphi 0, %s22
      %p19 = scmp.ge.s32.totalorder %s18, 4
      %s28 = sphi 0, %s30
      %s31 = sphi 0, %s28
      %s32 = sphi 0, %s31
      %s48 = sphi 0, %s32
      %s52 = sphi 0, %s52
      %s54 = sphi 0, %s52
      %s55 = sphi 0, %s54
      %s69 = sphi 0, %s55
      %s73 = sphi 0, %s73
      %s75 = sphi 0, %s73
      %s76 = sphi 0, %s75
      %s90 = sphi 0, %s76
      %s94 = sphi 0, %s94
      %s96 = sphi 0, %s94
      %s97 = sphi 0, %s96
      %s111 = sphi 0, %s97
      %s115 = sphi 0, %s115
      %s117 = sphi 0, %s115
      %s118 = sphi 0, %s117
      %s132 = sphi 0, %s118
      %s138 = sphi 0, %s140
      %s141 = sphi 0, %s138
      %s142 = sphi 0, %s141
      %s158 = sphi 0, %s142
    $region4: #{tpu_custom_call.1} parent=1 // loop_header_branch
      %21 = sbr.rel (%p19) target = $region8
    $region5: #{tpu_custom_call.1} parent=1 // loop_body
      %s23 = ssub.s32 %s18, 1
      %s24 = ssub.s32 %s18, 2
      %s25 = sadd.s32 %s18, 1
      %s26 = ssub.s32 %s18, %s25
      %p27 = scmp.eq.s32.totalorder %s26, 0
      %s29 = sadd.s32 %s28, 1
      %s30 = scalar_select %p27, %s28, %s29
      %p33 = pneg %p27
      %p34 = scmp.eq.s32.totalorder %s18, 1
      %p35 = por %p33, %p34
      %p36 = scmp.ne.s32.totalorder %s28, %s31
      %p37 = scmp.eq.s32.totalorder %s18, 0
      %p38 = por %p36, %p37
      %p39 = scmp.ne.s32.totalorder %s28, %s31
      %p40 = scmp.eq.s32.totalorder %s23, 1
      %p41 = por %p39, %p40
      %p42 = scmp.ne.s32.totalorder %s31, %s32
      %p43 = scmp.eq.s32.totalorder %s23, 0
      %p44 = por %p42, %p43
      %p45 = scmp.ne.s32.totalorder %s31, %s32
      %p46 = scmp.eq.s32.totalorder %s24, 1
      %p47 = por %p45, %p46
      %p49 = scmp.ne.s32.totalorder %s32, %s48
      %p50 = scmp.eq.s32.totalorder %s24, 0
      %p51 = por %p49, %p50
      %s53 = sadd.s32 %s52, 1
      %p56 = scmp.eq.s32.totalorder %s18, 1
      %p57 = scmp.ne.s32.totalorder %s52, %s54
      %p58 = scmp.eq.s32.totalorder %s18, 0
      %p59 = por %p57, %p58
      %p60 = scmp.ne.s32.totalorder %s52, %s54
      %p61 = scmp.eq.s32.totalorder %s23, 1
      %p62 = por %p60, %p61
      %p63 = scmp.ne.s32.totalorder %s54, %s55
      %p64 = scmp.eq.s32.totalorder %s23, 0
      %p65 = por %p63, %p64
      %p66 = scmp.ne.s32.totalorder %s54, %s55
      %p67 = scmp.eq.s32.totalorder %s24, 1
      %p68 = por %p66, %p67
      %p70 = scmp.ne.s32.totalorder %s55, %s69
      %p71 = scmp.eq.s32.totalorder %s24, 0
      %p72 = por %p70, %p71
      %s74 = sadd.s32 %s73, 1
      %p77 = scmp.eq.s32.totalorder %s18, 1
      %p78 = scmp.ne.s32.totalorder %s73, %s75
      %p79 = scmp.eq.s32.totalorder %s18, 0
      %p80 = por %p78, %p79
      %p81 = scmp.ne.s32.totalorder %s73, %s75
      %p82 = scmp.eq.s32.totalorder %s23, 1
      %p83 = por %p81, %p82
      %p84 = scmp.ne.s32.totalorder %s75, %s76
      %p85 = scmp.eq.s32.totalorder %s23, 0
      %p86 = por %p84, %p85
      %p87 = scmp.ne.s32.totalorder %s75, %s76
      %p88 = scmp.eq.s32.totalorder %s24, 1
      %p89 = por %p87, %p88
      %p91 = scmp.ne.s32.totalorder %s76, %s90
      %p92 = scmp.eq.s32.totalorder %s24, 0
      %p93 = por %p91, %p92
      %s95 = sadd.s32 %s94, 1
      %p98 = scmp.eq.s32.totalorder %s18, 1
      %p99 = scmp.ne.s32.totalorder %s94, %s96
      %p100 = scmp.eq.s32.totalorder %s18, 0
      %p101 = por %p99, %p100
      %p102 = scmp.ne.s32.totalorder %s94, %s96
      %p103 = scmp.eq.s32.totalorder %s23, 1
      %p104 = por %p102, %p103
      %p105 = scmp.ne.s32.totalorder %s96, %s97
      %p106 = scmp.eq.s32.totalorder %s23, 0
      %p107 = por %p105, %p106
      %p108 = scmp.ne.s32.totalorder %s96, %s97
      %p109 = scmp.eq.s32.totalorder %s24, 1
      %p110 = por %p108, %p109
      %p112 = scmp.ne.s32.totalorder %s97, %s111
      %p113 = scmp.eq.s32.totalorder %s24, 0
      %p114 = por %p112, %p113
      %s116 = sadd.s32 %s115, 1
      %p119 = scmp.eq.s32.totalorder %s18, 1
      %p120 = scmp.ne.s32.totalorder %s115, %s117
      %p121 = scmp.eq.s32.totalorder %s18, 0
      %p122 = por %p120, %p121
      %p123 = scmp.ne.s32.totalorder %s115, %s117
      %p124 = scmp.eq.s32.totalorder %s23, 1
      %p125 = por %p123, %p124
      %p126 = scmp.ne.s32.totalorder %s117, %s118
      %p127 = scmp.eq.s32.totalorder %s23, 0
      %p128 = por %p126, %p127
      %p129 = scmp.ne.s32.totalorder %s117, %s118
      %p130 = scmp.eq.s32.totalorder %s24, 1
      %p131 = por %p129, %p130
      %p133 = scmp.ne.s32.totalorder %s118, %s132
      %p134 = scmp.eq.s32.totalorder %s24, 0
      %p135 = por %p133, %p134
      %s136 = ssub.s32 %s18, %s25
      %p137 = scmp.eq.s32.totalorder %s136, 0
      %s139 = sadd.s32 %s138, 1
      %s140 = scalar_select %p137, %s138, %s139
      %p143 = pneg %p137
      %p144 = scmp.eq.s32.totalorder %s18, 1
      %p145 = por %p143, %p144
      %p146 = scmp.ne.s32.totalorder %s138, %s141
      %p147 = scmp.eq.s32.totalorder %s18, 0
      %p148 = por %p146, %p147
      %p149 = scmp.ne.s32.totalorder %s138, %s141
      %p150 = scmp.eq.s32.totalorder %s23, 1
      %p151 = por %p149, %p150
      %p152 = scmp.ne.s32.totalorder %s141, %s142
      %p153 = scmp.eq.s32.totalorder %s23, 0
      %p154 = por %p152, %p153
      %p155 = scmp.ne.s32.totalorder %s141, %s142
      %p156 = scmp.eq.s32.totalorder %s24, 1
      %p157 = por %p155, %p156
      %p159 = scmp.ne.s32.totalorder %s142, %s158
      %p160 = scmp.eq.s32.totalorder %s24, 0
      %p161 = por %p159, %p160
      %p162 = scmp.le.s32.totalorder 1, %s18
      %p163 = scmp.lt.s32.totalorder %s18, 3
      %p164 = pnand %p162, %p163
      %p165 = pneg %p164
      // Predicated region
      $region9: #{tpu_custom_call.1} parent=5 // pred_check
        _
      $region10: #{tpu_custom_call.1} parent=5 // pred_check_branch
        %167 = sbr.rel (%p164) target = $region12
      $region11: #{tpu_custom_call.1} parent=5 // pred_region
        %s168 = ssub.s32 %s18, 1
        // Predicated region
        $region13: #{tpu_custom_call.1} parent=11 // pred_check
          %p169 = pneg %p65
        $region14: #{tpu_custom_call.1} parent=11 // pred_check_branch
          %171 = sbr.rel (%p169) target = $region16
        $region15: #{tpu_custom_call.1} parent=11 // pred_region
          %s173 = ssub.s32 6144, 6144
          %174 = vsyncadd [#allocation6], %s173
          %s175 = sshll.u32 [#allocation5], 4
          %s176 = int_to_ptr.vmem [resolvable:$true] %s175
          %181 = dma.hbm_to_vmem [thread:$0]  %s1, 6144, %s176, [#allocation6], 128, 128, 8
        $region16: #{tpu_custom_call.1} parent=11 // pred_fallthru
          _
        // Predicated region
        $region17: #{tpu_custom_call.1} parent=11 // pred_check
          %p182 = pneg %p86
        $region18: #{tpu_custom_call.1} parent=11 // pred_check_branch
          %184 = sbr.rel (%p182) target = $region20
        $region19: #{tpu_custom_call.1} parent=11 // pred_region
          _
        $region20: #{tpu_custom_call.1} parent=11 // pred_fallthru
          _
        // Predicated region
        $region21: #{tpu_custom_call.1} parent=11 // pred_check
          %p185 = pneg %p107
        $region22: #{tpu_custom_call.1} parent=11 // pred_check_branch
          %187 = sbr.rel (%p185) target = $region24
        $region23: #{tpu_custom_call.1} parent=11 // pred_region
          %s189 = ssub.s32 6144, 6144
          %190 = vsyncadd [#allocation6], %s189
          %s191 = sshll.u32 [#allocation7], 4
          %s192 = int_to_ptr.vmem [resolvable:$true] %s191
          %197 = dma.hbm_to_vmem [thread:$0]  %s3, 6144, %s192, [#allocation6], 128, 128, 8
        $region24: #{tpu_custom_call.1} parent=11 // pred_fallthru
          _
        // Predicated region
        $region25: #{tpu_custom_call.1} parent=11 // pred_check
          %p198 = pneg %p128
        $region26: #{tpu_custom_call.1} parent=11 // pred_check_branch
          %200 = sbr.rel (%p198) target = $region28
        $region27: #{tpu_custom_call.1} parent=11 // pred_region
          _
        $region28: #{tpu_custom_call.1} parent=11 // pred_fallthru
          _
      $region12: #{tpu_custom_call.1} parent=5 // pred_fallthru
        _
      %p201 = scmp.lt.s32.totalorder %s18, 2
      // Predicated region
      $region29: #{tpu_custom_call.1} parent=5 // pred_check
        %p202 = pneg %p201
      $region30: #{tpu_custom_call.1} parent=5 // pred_check_branch
        %204 = sbr.rel (%p202) target = $region32
      $region31: #{tpu_custom_call.1} parent=5 // pred_region
        // Predicated region
        $region33: #{tpu_custom_call.1} parent=31 // pred_check
          %p205 = pneg %p38
        $region34: #{tpu_custom_call.1} parent=31 // pred_check_branch
          %207 = sbr.rel (%p205) target = $region36
        $region35: #{tpu_custom_call.1} parent=31 // pred_region
          %s208 = sand.u32 %s28, 1
          %s209 = scalar_lea.sflag [#allocation3], %s208
          %s210 = sand.u32 %s28, 1
          %s211 = smul.addr %s210, 64
          %s212 = scalar_lea.vmem [#allocation2], %s211
          %s213 = smul.u32 8, %s18
          %s215 = ssub.s32 1024, 1024
          %216 = vsyncadd %s209, %s215
          %s217 = smul.addr %s213, 128
          %s218 = scalar_lea.hbm %s0, %s217
          %s219 = sshll.u32 %s212, 4
          %s220 = int_to_ptr.vmem [resolvable:$true] %s219
          %225 = dma.hbm_to_vmem [thread:$0]  %s218, 1024, %s220, %s209, 128, 128, 8
        $region36: #{tpu_custom_call.1} parent=31 // pred_fallthru
          _
      $region32: #{tpu_custom_call.1} parent=5 // pred_fallthru
        _
      %p226 = scmp.le.s32.totalorder 1, %s18
      %p227 = scmp.lt.s32.totalorder %s18, 3
      %p228 = pnand %p226, %p227
      %p229 = pneg %p228
      // Predicated region
      $region37: #{tpu_custom_call.1} parent=5 // pred_check
        _
      $region38: #{tpu_custom_call.1} parent=5 // pred_check_branch
        %231 = sbr.rel (%p228) target = $region40
      $region39: #{tpu_custom_call.1} parent=5 // pred_region
        %s232 = ssub.s32 %s18, 1
        %s233 = sand.u32 %s31, 1
        %s234 = scalar_lea.sflag [#allocation3], %s233
        %s235 = sand.u32 %s31, 1
        %s236 = smul.addr %s235, 64
        %s237 = scalar_lea.vmem [#allocation2], %s236
        // Predicated region
        $region41: #{tpu_custom_call.1} parent=39 // pred_check
          %p238 = pneg %p44
        $region42: #{tpu_custom_call.1} parent=39 // pred_check_branch
          %240 = sbr.rel (%p238) target = $region44
        $region43: #{tpu_custom_call.1} parent=39 // pred_region
          %241 = dma.done %s234, 1024
        $region44: #{tpu_custom_call.1} parent=39 // pred_fallthru
          _
        // Predicated region
        $region45: #{tpu_custom_call.1} parent=39 // pred_check
          %p242 = pneg %p65
        $region46: #{tpu_custom_call.1} parent=39 // pred_check_branch
          %244 = sbr.rel (%p242) target = $region48
        $region47: #{tpu_custom_call.1} parent=39 // pred_region
          %245 = dma.done [#allocation6], 6144
        $region48: #{tpu_custom_call.1} parent=39 // pred_fallthru
          _
        // Predicated region
        $region49: #{tpu_custom_call.1} parent=39 // pred_check
          %p246 = pneg %p107
        $region50: #{tpu_custom_call.1} parent=39 // pred_check_branch
          %248 = sbr.rel (%p246) target = $region52
        $region51: #{tpu_custom_call.1} parent=39 // pred_region
          %249 = dma.done [#allocation6], 6144
        $region52: #{tpu_custom_call.1} parent=39 // pred_fallthru
          _
        %s250 = sand.u32 %s31, 1
        %s251 = scalar_lea.sflag [#allocation3], %s250
        %s252 = sand.u32 %s31, 1
        %s253 = smul.addr %s252, 64
        %s254 = scalar_lea.vmem [#allocation2], %s253
        %p255 = pneg %p44
        %p256 = pneg %p41
        %p257 = pneg %p65
        %p258 = pneg %p62
        %p259 = pneg %p86
        %p260 = pneg %p83
        %p261 = pneg %p107
        %p262 = pneg %p104
        %p263 = pneg %p128
        %p264 = pneg %p125
        %p265 = pneg %p154
        %p266 = pneg %p151
        %s267 = sand.u32 %s141, 1
        %s268 = scalar_lea.sflag [#allocation4], %s267
        %s269 = sand.u32 %s141, 1
        %s270 = smul.addr %s269, 64
        %s271 = scalar_lea.vmem [#allocation8], %s270
        %s272 = smul.u32 8, %s23
        %s273 = smul.u32 8, %s23
        %v274 = vld [vmem:[%s237] sm:$0xff]
        %v275 = vld [vmem:[%s237 + $0x8] sm:$0xff]
        %v276 = vld [vmem:[%s237 + $0x10] sm:$0xff]
        %v277 = vld [vmem:[%s237 + $0x18] sm:$0xff]
        %v278 = vld [vmem:[%s237 + $0x20] sm:$0xff]
        %v279 = vld [vmem:[%s237 + $0x28] sm:$0xff]
        %v280 = vld [vmem:[%s237 + $0x30] sm:$0xff]
        %v281 = vld [vmem:[%s237 + $0x38] sm:$0xff]
        %v282 = vld [vmem:[%s2] sm:$0x1]
        %v283 = vlaneseq
        %v284 = vshrl.u32 %v283, 7
        %v285 = vadd.s32 %v284, 8
        %v286 = vadd.s32 %v284, 16
        %v287 = vadd.s32 %v284, 24
        %v288 = vadd.s32 %v284, 32
        %v289 = vadd.s32 %v284, 40
        %v290 = vadd.s32 %v284, 48
        %v291 = vadd.s32 %v284, 56
        %vm292 = vcmp.lt.s32.totalorder %v284, 0
        %v293 = vsub.s32 0, %v284
        %v294 = vsel %vm292, %v293, %v284
        %v295 = vshrl.u32 %v294, 4
        %v296 = vand.u32 %v294, 15
        %v297 = vsub.s32 0, %v296
        %v298 = vsel %vm292, %v297, %v296
        %vm299 = vcmp.lt.s32.totalorder %v285, 0
        %v300 = vsub.s32 0, %v285
        %v301 = vsel %vm299, %v300, %v285
        %v302 = vshrl.u32 %v301, 4
        %v303 = vand.u32 %v301, 15
        %v304 = vsub.s32 0, %v303
        %v305 = vsel %vm299, %v304, %v303
        %vm306 = vcmp.lt.s32.totalorder %v286, 0
        %v307 = vsub.s32 0, %v286
        %v308 = vsel %vm306, %v307, %v286
        %v309 = vshrl.u32 %v308, 4
        %v310 = vand.u32 %v308, 15
        %v311 = vsub.s32 0, %v310
        %v312 = vsel %vm306, %v311, %v310
        %vm313 = vcmp.lt.s32.totalorder %v287, 0
        %v314 = vsub.s32 0, %v287
        %v315 = vsel %vm313, %v314, %v287
        %v316 = vshrl.u32 %v315, 4
        %v317 = vand.u32 %v315, 15
        %v318 = vsub.s32 0, %v317
        %v319 = vsel %vm313, %v318, %v317
        %vm320 = vcmp.lt.s32.totalorder %v288, 0
        %v321 = vsub.s32 0, %v288
        %v322 = vsel %vm320, %v321, %v288
        %v323 = vshrl.u32 %v322, 4
        %v324 = vand.u32 %v322, 15
        %v325 = vsub.s32 0, %v324
        %v326 = vsel %vm320, %v325, %v324
        %vm327 = vcmp.lt.s32.totalorder %v289, 0
        %v328 = vsub.s32 0, %v289
        %v329 = vsel %vm327, %v328, %v289
        %v330 = vshrl.u32 %v329, 4
        %v331 = vand.u32 %v329, 15
        %v332 = vsub.s32 0, %v331
        %v333 = vsel %vm327, %v332, %v331
        %vm334 = vcmp.lt.s32.totalorder %v290, 0
        %v335 = vsub.s32 0, %v290
        %v336 = vsel %vm334, %v335, %v290
        %v337 = vshrl.u32 %v336, 4
        %v338 = vand.u32 %v336, 15
        %v339 = vsub.s32 0, %v338
        %v340 = vsel %vm334, %v339, %v338
        %vm341 = vcmp.lt.s32.totalorder %v291, 0
        %v342 = vsub.s32 0, %v291
        %v343 = vsel %vm341, %v342, %v291
        %v344 = vshrl.u32 %v343, 4
        %v345 = vand.u32 %v343, 15
        %v346 = vsub.s32 0, %v345
        %v347 = vsel %vm341, %v346, %v345
        %vm348 = vcmp.ne.s32.totalorder %v298, 0
        %vm349 = vcmp.ne.s32.totalorder %v305, 0
        %vm350 = vcmp.ne.s32.totalorder %v312, 0
        %vm351 = vcmp.ne.s32.totalorder %v319, 0
        %vm352 = vcmp.ne.s32.totalorder %v326, 0
        %vm353 = vcmp.ne.s32.totalorder %v333, 0
        %vm354 = vcmp.ne.s32.totalorder %v340, 0
        %vm355 = vcmp.ne.s32.totalorder %v347, 0
        %vm356 = vcmp.lt.s32.totalorder %v298, 0
        %vm357 = vcmp.lt.s32.totalorder %v305, 0
        %vm358 = vcmp.lt.s32.totalorder %v312, 0
        %vm359 = vcmp.lt.s32.totalorder %v319, 0
        %vm360 = vcmp.lt.s32.totalorder %v326, 0
        %vm361 = vcmp.lt.s32.totalorder %v333, 0
        %vm362 = vcmp.lt.s32.totalorder %v340, 0
        %vm363 = vcmp.lt.s32.totalorder %v347, 0
        %vm364 = vmand %vm356, %vm348
        %vm365 = vmand %vm357, %vm349
        %vm366 = vmand %vm358, %vm350
        %vm367 = vmand %vm359, %vm351
        %vm368 = vmand %vm360, %vm352
        %vm369 = vmand %vm361, %vm353
        %vm370 = vmand %vm362, %vm354
        %vm371 = vmand %vm363, %vm355
        %v372 = vadd.s32 %v298, 16
        %v373 = vadd.s32 %v305, 16
        %v374 = vadd.s32 %v312, 16
        %v375 = vadd.s32 %v319, 16
        %v376 = vadd.s32 %v326, 16
        %v377 = vadd.s32 %v333, 16
        %v378 = vadd.s32 %v340, 16
        %v379 = vadd.s32 %v347, 16
        %v380 = vsel %vm364, %v372, %v298
        %v381 = vsel %vm365, %v373, %v305
        %v382 = vsel %vm366, %v374, %v312
        %v383 = vsel %vm367, %v375, %v319
        %v384 = vsel %vm368, %v376, %v326
        %v385 = vsel %vm369, %v377, %v333
        %v386 = vsel %vm370, %v378, %v340
        %v387 = vsel %vm371, %v379, %v347
        %vm388 = vcmp.ne.s32.totalorder %v380, 0
        %vm389 = vcmp.ne.s32.totalorder %v381, 0
        %vm390 = vcmp.ne.s32.totalorder %v382, 0
        %vm391 = vcmp.ne.s32.totalorder %v383, 0
        %vm392 = vcmp.ne.s32.totalorder %v384, 0
        %vm393 = vcmp.ne.s32.totalorder %v385, 0
        %vm394 = vcmp.ne.s32.totalorder %v386, 0
        %vm395 = vcmp.ne.s32.totalorder %v387, 0
        %v396 = vrot.slane %v274, 7
        %v397 = vrot.slane %v275, 7
        %v398 = vrot.slane %v276, 7
        %v399 = vrot.slane %v277, 7
        %v400 = vrot.slane %v278, 7
        %v401 = vrot.slane %v279, 7
        %v402 = vrot.slane %v280, 7
        %v403 = vrot.slane %v281, 7
        %vm404 = vcmp.lt.s32.totalorder %v284, 1
        %v405 = vsel %vm404, %v402, %v403
        %v406 = vsel %vm404, %v401, %v402
        %v407 = vsel %vm404, %v400, %v401
        %v408 = vsel %vm404, %v399, %v400
        %v409 = vsel %vm404, %v398, %v399
        %v410 = vsel %vm404, %v397, %v398
        %v411 = vsel %vm404, %v396, %v397
        %v412 = vsel %vm404, %v403, %v396
        %v413 = vsel %vm388, %v412, 0.0
        %v414 = vsel %vm389, %v411, 0.0
        %v415 = vsel %vm390, %v410, 0.0
        %v416 = vsel %vm391, %v409, 0.0
        %v417 = vsel %vm392, %v408, 0.0
        %v418 = vsel %vm393, %v407, 0.0
        %v419 = vsel %vm394, %v406, 0.0
        %v420 = vsel %vm395, %v405, 0.0
        %vm421 = vcmp.ne.s32.totalorder %v380, 15
        %vm422 = vcmp.ne.s32.totalorder %v381, 15
        %vm423 = vcmp.ne.s32.totalorder %v382, 15
        %vm424 = vcmp.ne.s32.totalorder %v383, 15
        %vm425 = vcmp.ne.s32.totalorder %v384, 15
        %vm426 = vcmp.ne.s32.totalorder %v385, 15
        %vm427 = vcmp.ne.s32.totalorder %v386, 15
        %vm428 = vcmp.ne.s32.totalorder %v387, 15
        %v429 = vrot.slane %v274, 1
        %v430 = vrot.slane %v275, 1
        %v431 = vrot.slane %v276, 1
        %v432 = vrot.slane %v277, 1
        %v433 = vrot.slane %v278, 1
        %v434 = vrot.slane %v279, 1
        %v435 = vrot.slane %v280, 1
        %v436 = vrot.slane %v281, 1
        %vm437 = vcmp.lt.s32.totalorder %v284, 7
        %v438 = vsel %vm437, %v435, %v436
        %v439 = vsel %vm437, %v434, %v435
        %v440 = vsel %vm437, %v433, %v434
        %v441 = vsel %vm437, %v432, %v433
        %v442 = vsel %vm437, %v431, %v432
        %v443 = vsel %vm437, %v430, %v431
        %v444 = vsel %vm437, %v429, %v430
        %v445 = vsel %vm437, %v436, %v429
        %v446 = vsel %vm421, %v444, 0.0
        %v447 = vsel %vm422, %v443, 0.0
        %v448 = vsel %vm423, %v442, 0.0
        %v449 = vsel %vm424, %v441, 0.0
        %v450 = vsel %vm425, %v440, 0.0
        %v451 = vsel %vm426, %v439, 0.0
        %v452 = vsel %vm427, %v438, 0.0
        %v453 = vsel %vm428, %v445, 0.0
        %v454 = vld [vmem:[#allocation5] sm:$0xff]
        %v455 = vld [vmem:[#allocation5 + $0x8] sm:$0xff]
        %v456 = vld [vmem:[#allocation5 + $0x10] sm:$0xff]
        %v457 = vld [vmem:[#allocation5 + $0x18] sm:$0xff]
        %v458 = vld [vmem:[#allocation5 + $0x20] sm:$0xff]
        %v459 = vld [vmem:[#allocation5 + $0x28] sm:$0xff]
        %v460 = vld [vmem:[#allocation5 + $0x30] sm:$0xff]
        %v461 = vld [vmem:[#allocation5 + $0x38] sm:$0xff]
        %v462 = vld [vmem:[#allocation5 + $0x40] sm:$0xff]
        %v463 = vld [vmem:[#allocation5 + $0x48] sm:$0xff]
        %v464 = vld [vmem:[#allocation5 + $0x50] sm:$0xff]
        %v465 = vld [vmem:[#allocation5 + $0x58] sm:$0xff]
        %v466 = vld [vmem:[#allocation5 + $0x60] sm:$0xff]
        %v467 = vld [vmem:[#allocation5 + $0x68] sm:$0xff]
        %v468 = vld [vmem:[#allocation5 + $0x70] sm:$0xff]
        %v469 = vld [vmem:[#allocation5 + $0x78] sm:$0xff]
        %v470 = vld [vmem:[#allocation5 + $0x80] sm:$0xff]
        %v471 = vld [vmem:[#allocation5 + $0x88] sm:$0xff]
        %v472 = vld [vmem:[#allocation5 + $0x90] sm:$0xff]
        %v473 = vld [vmem:[#allocation5 + $0x98] sm:$0xff]
        %v474 = vld [vmem:[#allocation5 + $0xa0] sm:$0xff]
        %v475 = vld [vmem:[#allocation5 + $0xa8] sm:$0xff]
        %v476 = vld [vmem:[#allocation5 + $0xb0] sm:$0xff]
        %v477 = vld [vmem:[#allocation5 + $0xb8] sm:$0xff]
        %v478 = vld [vmem:[#allocation5 + $0xc0] sm:$0xff]
        %v479 = vld [vmem:[#allocation5 + $0xc8] sm:$0xff]
        %v480 = vld [vmem:[#allocation5 + $0xd0] sm:$0xff]
        %v481 = vld [vmem:[#allocation5 + $0xd8] sm:$0xff]
        %v482 = vld [vmem:[#allocation5 + $0xe0] sm:$0xff]
        %v483 = vld [vmem:[#allocation5 + $0xe8] sm:$0xff]
        %v484 = vld [vmem:[#allocation5 + $0xf0] sm:$0xff]
        %v485 = vld [vmem:[#allocation5 + $0xf8] sm:$0xff]
        %v486 = vld [vmem:[#allocation5 + $0x100] sm:$0xff]
        %v487 = vld [vmem:[#allocation5 + $0x108] sm:$0xff]
        %v488 = vld [vmem:[#allocation5 + $0x110] sm:$0xff]
        %v489 = vld [vmem:[#allocation5 + $0x118] sm:$0xff]
        %v490 = vld [vmem:[#allocation5 + $0x120] sm:$0xff]
        %v491 = vld [vmem:[#allocation5 + $0x128] sm:$0xff]
        %v492 = vld [vmem:[#allocation5 + $0x130] sm:$0xff]
        %v493 = vld [vmem:[#allocation5 + $0x138] sm:$0xff]
        %v494 = vld [vmem:[#allocation5 + $0x140] sm:$0xff]
        %v495 = vld [vmem:[#allocation5 + $0x148] sm:$0xff]
        %v496 = vld [vmem:[#allocation5 + $0x150] sm:$0xff]
        %v497 = vld [vmem:[#allocation5 + $0x158] sm:$0xff]
        %v498 = vld [vmem:[#allocation5 + $0x160] sm:$0xff]
        %v499 = vld [vmem:[#allocation5 + $0x168] sm:$0xff]
        %v500 = vld [vmem:[#allocation5 + $0x170] sm:$0xff]
        %v501 = vld [vmem:[#allocation5 + $0x178] sm:$0xff]
        %v503 = vlaneseq
        %v504 = vshrl.u32 %v503, 7
        %v505 = vsub.s32 0, %v504
        %v506 = vrot.slane %v282, %v505
        %508 = vmatprep.subr.mxu0 0.0
        %509 = vmatpush1.msra.mxu0 %v454
        %510 = vmatprep.subr.mxu0 0.0
        %511 = vmatpush1.msra.mxu0 %v455
        %512 = vmatprep.subr.mxu0 0.0
        %513 = vmatpush1.msra.mxu0 %v456
        %514 = vmatprep.subr.mxu0 0.0
        %515 = vmatpush1.msra.mxu0 %v457
        %516 = vmatprep.subr.mxu0 0.0
        %517 = vmatpush1.msra.mxu0 %v458
        %518 = vmatprep.subr.mxu0 0.0
        %519 = vmatpush1.msra.mxu0 %v459
        %520 = vmatprep.subr.mxu0 0.0
        %521 = vmatpush1.msra.mxu0 %v460
        %522 = vmatprep.subr.mxu0 0.0
        %523 = vmatpush1.msra.mxu0 %v461
        %524 = vmatprep.subr.mxu0 0.0
        %525 = vmatpush1.msra.mxu0 %v462
        %526 = vmatprep.subr.mxu0 0.0
        %527 = vmatpush1.msra.mxu0 %v463
        %528 = vmatprep.subr.mxu0 0.0
        %529 = vmatpush1.msra.mxu0 %v464
        %530 = vmatprep.subr.mxu0 0.0
        %531 = vmatpush1.msra.mxu0 %v465
        %532 = vmatprep.subr.mxu0 0.0
        %533 = vmatpush1.msra.mxu0 %v466
        %534 = vmatprep.subr.mxu0 0.0
        %535 = vmatpush1.msra.mxu0 %v467
        %536 = vmatprep.subr.mxu0 0.0
        %537 = vmatpush1.msra.mxu0 %v468
        %538 = vmatprep.subr.mxu0 0.0
        %539 = vmatpush1.msra.mxu0 %v469
        %540 = vmatprep.subr.mxu0 0.0
        %541 = vmatpush1.msra.mxu0 %v470
        %542 = vmatprep.subr.mxu0 0.0
        %543 = vmatpush1.msra.mxu0 %v471
        %544 = vmatprep.subr.mxu0 0.0
        %545 = vmatpush1.msra.mxu0 %v472
        %546 = vmatprep.subr.mxu0 0.0
        %547 = vmatpush1.msra.mxu0 %v473
        %548 = vmatprep.subr.mxu0 0.0
        %549 = vmatpush1.msra.mxu0 %v474
        %550 = vmatprep.subr.mxu0 0.0
        %551 = vmatpush1.msra.mxu0 %v475
        %552 = vmatprep.subr.mxu0 0.0
        %553 = vmatpush1.msra.mxu0 %v476
        %554 = vmatprep.subr.mxu0 0.0
        %555 = vmatpush1.msra.mxu0 %v477
        %556 = vmatprep.subr.mxu0 0.0
        %557 = vmatpush1.msra.mxu0 %v478
        %558 = vmatprep.subr.mxu0 0.0
        %559 = vmatpush1.msra.mxu0 %v479
        %560 = vmatprep.subr.mxu0 0.0
        %561 = vmatpush1.msra.mxu0 %v480
        %562 = vmatprep.subr.mxu0 0.0
        %563 = vmatpush1.msra.mxu0 %v481
        %564 = vmatprep.subr.mxu0 0.0
        %565 = vmatpush1.msra.mxu0 %v482
        %566 = vmatprep.subr.mxu0 0.0
        %567 = vmatpush1.msra.mxu0 %v483
        %568 = vmatprep.subr.mxu0 0.0
        %569 = vmatpush1.msra.mxu0 %v484
        %570 = vmatprep.subr.mxu0 0.0
        %571 = vmatpush1.msra.mxu0 %v485
        %572 = vmatprep.mubr.f32.mxu0 %v274
        %573 = vmatmul.mubr.f32.gmra.mrb[0].mxu0 %v413
        %v574 = vpop.f32.mrb[0].mxu0
        %v575 = vadd.f32 %v506, %v574
        %v576 = vpop.f32.mrb[0].mxu0
        %577 = vmatprep.mubr.f32.mxu0 %v275
        %578 = vmatmul.mubr.f32.gmra.mrb[0].mxu0 %v414
        %v579 = vpop.f32.mrb[0].mxu0
        %v580 = vadd.f32 %v506, %v579
        %v581 = vpop.f32.mrb[0].mxu0
        %582 = vmatprep.mubr.f32.mxu0 %v276
        %583 = vmatmul.mubr.f32.gmra.mrb[0].mxu0 %v415
        %v584 = vpop.f32.mrb[0].mxu0
        %v585 = vadd.f32 %v506, %v584
        %v586 = vpop.f32.mrb[0].mxu0
        %587 = vmatprep.mubr.f32.mxu0 %v277
        %588 = vmatmul.mubr.f32.gmra.mrb[0].mxu0 %v416
        %v589 = vpop.f32.mrb[0].mxu0
        %v590 = vadd.f32 %v506, %v589
        %v591 = vpop.f32.mrb[0].mxu0
        %592 = vmatprep.mubr.f32.mxu0 %v278
        %593 = vmatmul.mubr.f32.gmra.mrb[0].mxu0 %v417
        %v594 = vpop.f32.mrb[0].mxu0
        %v595 = vadd.f32 %v506, %v594
        %v596 = vpop.f32.mrb[0].mxu0
        %597 = vmatprep.mubr.f32.mxu0 %v279
        %598 = vmatmul.mubr.f32.gmra.mrb[0].mxu0 %v418
        %v599 = vpop.f32.mrb[0].mxu0
        %v600 = vadd.f32 %v506, %v599
        %v601 = vpop.f32.mrb[0].mxu0
        %602 = vmatprep.mubr.f32.mxu0 %v280
        %603 = vmatmul.mubr.f32.gmra.mrb[0].mxu0 %v419
        %v604 = vpop.f32.mrb[0].mxu0
        %v605 = vadd.f32 %v506, %v604
        %v606 = vpop.f32.mrb[0].mxu0
        %607 = vmatprep.mubr.f32.mxu0 %v281
        %608 = vmatmul.mubr.f32.gmra.mrb[0].mxu0 %v420
        %v609 = vpop.f32.mrb[0].mxu0
        %v610 = vadd.f32 %v506, %v609
        %v611 = vpop.f32.mrb[0].mxu0
        %612 = vdwg.mxu0
        %613 = vmatprep.subr.mxu0 0.0
        %614 = vmatpush1.msra.mxu0 %v486
        %615 = vmatprep.subr.mxu0 0.0
        %616 = vmatpush1.msra.mxu0 %v487
        %617 = vmatprep.subr.mxu0 0.0
        %618 = vmatpush1.msra.mxu0 %v488
        %619 = vmatprep.subr.mxu0 0.0
        %620 = vmatpush1.msra.mxu0 %v489
        %621 = vmatprep.subr.mxu0 0.0
        %622 = vmatpush1.msra.mxu0 %v490
        %623 = vmatprep.subr.mxu0 0.0
        %624 = vmatpush1.msra.mxu0 %v491
        %625 = vmatprep.subr.mxu0 0.0
        %626 = vmatpush1.msra.mxu0 %v492
        %627 = vmatprep.subr.mxu0 0.0
        %628 = vmatpush1.msra.mxu0 %v493
        %629 = vmatprep.subr.mxu0 0.0
        %630 = vmatpush1.msra.mxu0 %v494
        %631 = vmatprep.subr.mxu0 0.0
        %632 = vmatpush1.msra.mxu0 %v495
        %633 = vmatprep.subr.mxu0 0.0
        %634 = vmatpush1.msra.mxu0 %v496
        %635 = vmatprep.subr.mxu0 0.0
        %636 = vmatpush1.msra.mxu0 %v497
        %637 = vmatprep.subr.mxu0 0.0
        %638 = vmatpush1.msra.mxu0 %v498
        %639 = vmatprep.subr.mxu0 0.0
        %640 = vmatpush1.msra.mxu0 %v499
        %641 = vmatprep.subr.mxu0 0.0
        %642 = vmatpush1.msra.mxu0 %v500
        %643 = vmatprep.subr.mxu0 0.0
        %644 = vmatpush1.msra.mxu0 %v501
        %645 = vmatprep.subr.mxu0 0.0
        %646 = vmatpush1.msra.mxu0 0.0
        %647 = vmatprep.subr.mxu0 0.0
        %648 = vmatpush1.msra.mxu0 0.0
        %649 = vmatprep.subr.mxu0 0.0
        %650 = vmatpush1.msra.mxu0 0.0
        %651 = vmatprep.subr.mxu0 0.0
        %652 = vmatpush1.msra.mxu0 0.0
        %653 = vmatprep.subr.mxu0 0.0
        %654 = vmatpush1.msra.mxu0 0.0
        %655 = vmatprep.subr.mxu0 0.0
        %656 = vmatpush1.msra.mxu0 0.0
        %657 = vmatprep.subr.mxu0 0.0
        %658 = vmatpush1.msra.mxu0 0.0
        %659 = vmatprep.subr.mxu0 0.0
        %660 = vmatpush1.msra.mxu0 0.0
        %661 = vmatprep.subr.mxu0 0.0
        %662 = vmatpush1.msra.mxu0 0.0
        %663 = vmatprep.subr.mxu0 0.0
        %664 = vmatpush1.msra.mxu0 0.0
        %665 = vmatprep.subr.mxu0 0.0
        %666 = vmatpush1.msra.mxu0 0.0
        %667 = vmatprep.subr.mxu0 0.0
        %668 = vmatpush1.msra.mxu0 0.0
        %669 = vmatprep.subr.mxu0 0.0
        %670 = vmatpush1.msra.mxu0 0.0
        %671 = vmatprep.subr.mxu0 0.0
        %672 = vmatpush1.msra.mxu0 0.0
        %673 = vmatprep.subr.mxu0 0.0
        %674 = vmatpush1.msra.mxu0 0.0
        %675 = vmatprep.subr.mxu0 0.0
        %676 = vmatpush1.msra.mxu0 0.0
        %677 = vmatprep.mubr.f32.mxu0 0.0
        %678 = vmatmul.mubr.f32.gmra.mrb[0].mxu0 %v446
        %v679 = vpop.f32.mrb[0].mxu0
        %v680 = vadd.f32 %v575, %v679
        %v681 = vpop.f32.mrb[0].mxu0
        %682 = vmatprep.mubr.f32.mxu0 0.0
        %683 = vmatmul.mubr.f32.gmra.mrb[0].mxu0 %v447
        %v684 = vpop.f32.mrb[0].mxu0
        %v685 = vadd.f32 %v580, %v684
        %v686 = vpop.f32.mrb[0].mxu0
        %687 = vmatprep.mubr.f32.mxu0 0.0
        %688 = vmatmul.mubr.f32.gmra.mrb[0].mxu0 %v448
        %v689 = vpop.f32.mrb[0].mxu0
        %v690 = vadd.f32 %v585, %v689
        %v691 = vpop.f32.mrb[0].mxu0
        %692 = vmatprep.mubr.f32.mxu0 0.0
        %693 = vmatmul.mubr.f32.gmra.mrb[0].mxu0 %v449
        %v694 = vpop.f32.mrb[0].mxu0
        %v695 = vadd.f32 %v590, %v694
        %v696 = vpop.f32.mrb[0].mxu0
        %697 = vmatprep.mubr.f32.mxu0 0.0
        %698 = vmatmul.mubr.f32.gmra.mrb[0].mxu0 %v450
        %v699 = vpop.f32.mrb[0].mxu0
        %v700 = vadd.f32 %v595, %v699
        %v701 = vpop.f32.mrb[0].mxu0
        %702 = vmatprep.mubr.f32.mxu0 0.0
        %703 = vmatmul.mubr.f32.gmra.mrb[0].mxu0 %v451
        %v704 = vpop.f32.mrb[0].mxu0
        %v705 = vadd.f32 %v600, %v704
        %v706 = vpop.f32.mrb[0].mxu0
        %707 = vmatprep.mubr.f32.mxu0 0.0
        %708 = vmatmul.mubr.f32.gmra.mrb[0].mxu0 %v452
        %v709 = vpop.f32.mrb[0].mxu0
        %v710 = vadd.f32 %v605, %v709
        %v711 = vpop.f32.mrb[0].mxu0
        %712 = vmatprep.mubr.f32.mxu0 0.0
        %713 = vmatmul.mubr.f32.gmra.mrb[0].mxu0 %v453
        %v714 = vpop.f32.mrb[0].mxu0
        %v715 = vadd.f32 %v610, %v714
        %v716 = vpop.f32.mrb[0].mxu0
        %717 = vdwg.mxu0
        %v718 = vadd.f32 %v680, %v685
        %v719 = vrot.slane %v718, 4
        %v720 = vadd.f32 %v718, %v719
        %v721 = vrot.slane %v720, 2
        %v722 = vadd.f32 %v720, %v721
        %v723 = vrot.slane %v722, 1
        %v724 = vadd.f32 %v722, %v723
        %725 = vrot.lane.b32.xlu0 %v724, 8
        %v726 = vpop.permute.xlu0 %725
        %v727 = vadd.f32 %v724, %v726
        %728 = vrot.lane.b32.xlu0 %v727, 16
        %v729 = vpop.permute.xlu0 %728
        %v730 = vadd.f32 %v727, %v729
        %731 = vrot.lane.b32.xlu0 %v730, 32
        %v732 = vpop.permute.xlu0 %731
        %v733 = vadd.f32 %v730, %v732
        %734 = vrot.lane.b32.xlu0 %v733, 64
        %v735 = vpop.permute.xlu0 %734
        %v736 = vadd.f32 %v733, %v735
        %v737 = vmul.f32 %v736, 0.00390625
        %v738 = vlaneseq
        %v739 = vshrl.u32 %v738, 7
        %v740 = vsub.s32 0, %v739
        %v741 = vrot.slane %v737, %v740
        %v742 = vsub.f32 %v680, %v741
        %v743 = vsub.f32 %v685, %v741
        %v744 = vmul.f32 %v742, %v742
        %v745 = vmul.f32 %v743, %v743
        %v746 = vadd.f32 %v744, %v745
        %v747 = vrot.slane %v746, 4
        %v748 = vadd.f32 %v746, %v747
        %v749 = vrot.slane %v748, 2
        %v750 = vadd.f32 %v748, %v749
        %v751 = vrot.slane %v750, 1
        %v752 = vadd.f32 %v750, %v751
        %753 = vrot.lane.b32.xlu0 %v752, 8
        %v754 = vpop.permute.xlu0 %753
        %v755 = vadd.f32 %v752, %v754
        %756 = vrot.lane.b32.xlu0 %v755, 16
        %v757 = vpop.permute.xlu0 %756
        %v758 = vadd.f32 %v755, %v757
        %759 = vrot.lane.b32.xlu0 %v758, 32
        %v760 = vpop.permute.xlu0 %759
        %v761 = vadd.f32 %v758, %v760
        %762 = vrot.lane.b32.xlu0 %v761, 64
        %v763 = vpop.permute.xlu0 %762
        %v764 = vadd.f32 %v761, %v763
        %v765 = vmul.f32 %v764, 0.00390625
        %v766 = vadd.f32 %v765, 1e-05
        %v767 = vrsqrt.pop %v766
        %v768 = vlaneseq
        %v769 = vshrl.u32 %v768, 7
        %v770 = vsub.s32 0, %v769
        %v771 = vrot.slane %v767, %v770
        %v772 = vmul.f32 %v742, %v771
        %v773 = vmul.f32 %v743, %v771
        %v774 = vadd.f32 %v690, %v695
        %v775 = vrot.slane %v774, 4
        %v776 = vadd.f32 %v774, %v775
        %v777 = vrot.slane %v776, 2
        %v778 = vadd.f32 %v776, %v777
        %v779 = vrot.slane %v778, 1
        %v780 = vadd.f32 %v778, %v779
        %781 = vrot.lane.b32.xlu0 %v780, 8
        %v782 = vpop.permute.xlu0 %781
        %v783 = vadd.f32 %v780, %v782
        %784 = vrot.lane.b32.xlu0 %v783, 16
        %v785 = vpop.permute.xlu0 %784
        %v786 = vadd.f32 %v783, %v785
        %787 = vrot.lane.b32.xlu0 %v786, 32
        %v788 = vpop.permute.xlu0 %787
        %v789 = vadd.f32 %v786, %v788
        %790 = vrot.lane.b32.xlu0 %v789, 64
        %v791 = vpop.permute.xlu0 %790
        %v792 = vadd.f32 %v789, %v791
        %v793 = vmul.f32 %v792, 0.00390625
        %v794 = vlaneseq
        %v795 = vshrl.u32 %v794, 7
        %v796 = vsub.s32 0, %v795
        %v797 = vrot.slane %v793, %v796
        %v798 = vsub.f32 %v690, %v797
        %v799 = vsub.f32 %v695, %v797
        %v800 = vmul.f32 %v798, %v798
        %v801 = vmul.f32 %v799, %v799
        %v802 = vadd.f32 %v800, %v801
        %v803 = vrot.slane %v802, 4
        %v804 = vadd.f32 %v802, %v803
        %v805 = vrot.slane %v804, 2
        %v806 = vadd.f32 %v804, %v805
        %v807 = vrot.slane %v806, 1
        %v808 = vadd.f32 %v806, %v807
        %809 = vrot.lane.b32.xlu0 %v808, 8
        %v810 = vpop.permute.xlu0 %809
        %v811 = vadd.f32 %v808, %v810
        %812 = vrot.lane.b32.xlu0 %v811, 16
        %v813 = vpop.permute.xlu0 %812
        %v814 = vadd.f32 %v811, %v813
        %815 = vrot.lane.b32.xlu0 %v814, 32
        %v816 = vpop.permute.xlu0 %815
        %v817 = vadd.f32 %v814, %v816
        %818 = vrot.lane.b32.xlu0 %v817, 64
        %v819 = vpop.permute.xlu0 %818
        %v820 = vadd.f32 %v817, %v819
        %v821 = vmul.f32 %v820, 0.00390625
        %v822 = vadd.f32 %v821, 1e-05
        %v823 = vrsqrt.pop %v822
        %v824 = vlaneseq
        %v825 = vshrl.u32 %v824, 7
        %v826 = vsub.s32 0, %v825
        %v827 = vrot.slane %v823, %v826
        %v828 = vmul.f32 %v798, %v827
        %v829 = vmul.f32 %v799, %v827
        %v830 = vadd.f32 %v700, %v705
        %v831 = vrot.slane %v830, 4
        %v832 = vadd.f32 %v830, %v831
        %v833 = vrot.slane %v832, 2
        %v834 = vadd.f32 %v832, %v833
        %v835 = vrot.slane %v834, 1
        %v836 = vadd.f32 %v834, %v835
        %837 = vrot.lane.b32.xlu0 %v836, 8
        %v838 = vpop.permute.xlu0 %837
        %v839 = vadd.f32 %v836, %v838
        %840 = vrot.lane.b32.xlu0 %v839, 16
        %v841 = vpop.permute.xlu0 %840
        %v842 = vadd.f32 %v839, %v841
        %843 = vrot.lane.b32.xlu0 %v842, 32
        %v844 = vpop.permute.xlu0 %843
        %v845 = vadd.f32 %v842, %v844
        %846 = vrot.lane.b32.xlu0 %v845, 64
        %v847 = vpop.permute.xlu0 %846
        %v848 = vadd.f32 %v845, %v847
        %v849 = vmul.f32 %v848, 0.00390625
        %v850 = vlaneseq
        %v851 = vshrl.u32 %v850, 7
        %v852 = vsub.s32 0, %v851
        %v853 = vrot.slane %v849, %v852
        %v854 = vsub.f32 %v700, %v853
        %v855 = vsub.f32 %v705, %v853
        %v856 = vmul.f32 %v854, %v854
        %v857 = vmul.f32 %v855, %v855
        %v858 = vadd.f32 %v856, %v857
        %v859 = vrot.slane %v858, 4
        %v860 = vadd.f32 %v858, %v859
        %v861 = vrot.slane %v860, 2
        %v862 = vadd.f32 %v860, %v861
        %v863 = vrot.slane %v862, 1
        %v864 = vadd.f32 %v862, %v863
        %865 = vrot.lane.b32.xlu0 %v864, 8
        %v866 = vpop.permute.xlu0 %865
        %v867 = vadd.f32 %v864, %v866
        %868 = vrot.lane.b32.xlu0 %v867, 16
        %v869 = vpop.permute.xlu0 %868
        %v870 = vadd.f32 %v867, %v869
        %871 = vrot.lane.b32.xlu0 %v870, 32
        %v872 = vpop.permute.xlu0 %871
        %v873 = vadd.f32 %v870, %v872
        %874 = vrot.lane.b32.xlu0 %v873, 64
        %v875 = vpop.permute.xlu0 %874
        %v876 = vadd.f32 %v873, %v875
        %v877 = vmul.f32 %v876, 0.00390625
        %v878 = vadd.f32 %v877, 1e-05
        %v879 = vrsqrt.pop %v878
        %v880 = vlaneseq
        %v881 = vshrl.u32 %v880, 7
        %v882 = vsub.s32 0, %v881
        %v883 = vrot.slane %v879, %v882
        %v884 = vmul.f32 %v854, %v883
        %v885 = vmul.f32 %v855, %v883
        %v886 = vadd.f32 %v710, %v715
        %v887 = vrot.slane %v886, 4
        %v888 = vadd.f32 %v886, %v887
        %v889 = vrot.slane %v888, 2
        %v890 = vadd.f32 %v888, %v889
        %v891 = vrot.slane %v890, 1
        %v892 = vadd.f32 %v890, %v891
        %893 = vrot.lane.b32.xlu0 %v892, 8
        %v894 = vpop.permute.xlu0 %893
        %v895 = vadd.f32 %v892, %v894
        %896 = vrot.lane.b32.xlu0 %v895, 16
        %v897 = vpop.permute.xlu0 %896
        %v898 = vadd.f32 %v895, %v897
        %899 = vrot.lane.b32.xlu0 %v898, 32
        %v900 = vpop.permute.xlu0 %899
        %v901 = vadd.f32 %v898, %v900
        %902 = vrot.lane.b32.xlu0 %v901, 64
        %v903 = vpop.permute.xlu0 %902
        %v904 = vadd.f32 %v901, %v903
        %v905 = vmul.f32 %v904, 0.00390625
        %v906 = vlaneseq
        %v907 = vshrl.u32 %v906, 7
        %v908 = vsub.s32 0, %v907
        %v909 = vrot.slane %v905, %v908
        %v910 = vsub.f32 %v710, %v909
        %v911 = vsub.f32 %v715, %v909
        %v912 = vmul.f32 %v910, %v910
        %v913 = vmul.f32 %v911, %v911
        %v914 = vadd.f32 %v912, %v913
        %v915 = vrot.slane %v914, 4
        %v916 = vadd.f32 %v914, %v915
        %v917 = vrot.slane %v916, 2
        %v918 = vadd.f32 %v916, %v917
        %v919 = vrot.slane %v918, 1
        %v920 = vadd.f32 %v918, %v919
        %921 = vrot.lane.b32.xlu0 %v920, 8
        %v922 = vpop.permute.xlu0 %921
        %v923 = vadd.f32 %v920, %v922
        %924 = vrot.lane.b32.xlu0 %v923, 16
        %v925 = vpop.permute.xlu0 %924
        %v926 = vadd.f32 %v923, %v925
        %927 = vrot.lane.b32.xlu0 %v926, 32
        %v928 = vpop.permute.xlu0 %927
        %v929 = vadd.f32 %v926, %v928
        %930 = vrot.lane.b32.xlu0 %v929, 64
        %v931 = vpop.permute.xlu0 %930
        %v932 = vadd.f32 %v929, %v931
        %v933 = vmul.f32 %v932, 0.00390625
        %v934 = vadd.f32 %v933, 1e-05
        %v935 = vrsqrt.pop %v934
        %v936 = vlaneseq
        %v937 = vshrl.u32 %v936, 7
        %v938 = vsub.s32 0, %v937
        %v939 = vrot.slane %v935, %v938
        %v940 = vmul.f32 %v910, %v939
        %v941 = vmul.f32 %v911, %v939
        %v942 = vld [vmem:[%s4] sm:$0x1]
        %v943 = vrot.slane %v772, 7
        %v944 = vrot.slane %v773, 7
        %v945 = vrot.slane %v828, 7
        %v946 = vrot.slane %v829, 7
        %v947 = vrot.slane %v884, 7
        %v948 = vrot.slane %v885, 7
        %v949 = vrot.slane %v940, 7
        %v950 = vrot.slane %v941, 7
        %v951 = vsel %vm404, %v949, %v950
        %v952 = vsel %vm404, %v948, %v949
        %v953 = vsel %vm404, %v947, %v948
        %v954 = vsel %vm404, %v946, %v947
        %v955 = vsel %vm404, %v945, %v946
        %v956 = vsel %vm404, %v944, %v945
        %v957 = vsel %vm404, %v943, %v944
        %v958 = vsel %vm404, %v950, %v943
        %v959 = vsel %vm388, %v958, 0.0
        %v960 = vsel %vm389, %v957, 0.0
        %v961 = vsel %vm390, %v956, 0.0
        %v962 = vsel %vm391, %v955, 0.0
        %v963 = vsel %vm392, %v954, 0.0
        %v964 = vsel %vm393, %v953, 0.0
        %v965 = vsel %vm394, %v952, 0.0
        %v966 = vsel %vm395, %v951, 0.0
        %v967 = vrot.slane %v772, 1
        %v968 = vrot.slane %v773, 1
        %v969 = vrot.slane %v828, 1
        %v970 = vrot.slane %v829, 1
        %v971 = vrot.slane %v884, 1
        %v972 = vrot.slane %v885, 1
        %v973 = vrot.slane %v940, 1
        %v974 = vrot.slane %v941, 1
        %v975 = vsel %vm437, %v973, %v974
        %v976 = vsel %vm437, %v972, %v973
        %v977 = vsel %vm437, %v971, %v972
        %v978 = vsel %vm437, %v970, %v971
        %v979 = vsel %vm437, %v969, %v970
        %v980 = vsel %vm437, %v968, %v969
        %v981 = vsel %vm437, %v967, %v968
        %v982 = vsel %vm437, %v974, %v967
        %v983 = vsel %vm421, %v981, 0.0
        %v984 = vsel %vm422, %v980, 0.0
        %v985 = vsel %vm423, %v979, 0.0
        %v986 = vsel %vm424, %v978, 0.0
        %v987 = vsel %vm425, %v977, 0.0
        %v988 = vsel %vm426, %v976, 0.0
        %v989 = vsel %vm427, %v975, 0.0
        %v990 = vsel %vm428, %v982, 0.0
        %v991 = vld [vmem:[#allocation7] sm:$0xff]
        %v992 = vld [vmem:[#allocation7 + $0x8] sm:$0xff]
        %v993 = vld [vmem:[#allocation7 + $0x10] sm:$0xff]
        %v994 = vld [vmem:[#allocation7 + $0x18] sm:$0xff]
        %v995 = vld [vmem:[#allocation7 + $0x20] sm:$0xff]
        %v996 = vld [vmem:[#allocation7 + $0x28] sm:$0xff]
        %v997 = vld [vmem:[#allocation7 + $0x30] sm:$0xff]
        %v998 = vld [vmem:[#allocation7 + $0x38] sm:$0xff]
        %v999 = vld [vmem:[#allocation7 + $0x40] sm:$0xff]
        %v1000 = vld [vmem:[#allocation7 + $0x48] sm:$0xff]
        %v1001 = vld [vmem:[#allocation7 + $0x50] sm:$0xff]
        %v1002 = vld [vmem:[#allocation7 + $0x58] sm:$0xff]
        %v1003 = vld [vmem:[#allocation7 + $0x60] sm:$0xff]
        %v1004 = vld [vmem:[#allocation7 + $0x68] sm:$0xff]
        %v1005 = vld [vmem:[#allocation7 + $0x70] sm:$0xff]
        %v1006 = vld [vmem:[#allocation7 + $0x78] sm:$0xff]
        %v1007 = vld [vmem:[#allocation7 + $0x80] sm:$0xff]
        %v1008 = vld [vmem:[#allocation7 + $0x88] sm:$0xff]
        %v1009 = vld [vmem:[#allocation7 + $0x90] sm:$0xff]
        %v1010 = vld [vmem:[#allocation7 + $0x98] sm:$0xff]
        %v1011 = vld [vmem:[#allocation7 + $0xa0] sm:$0xff]
        %v1012 = vld [vmem:[#allocation7 + $0xa8] sm:$0xff]
        %v1013 = vld [vmem:[#allocation7 + $0xb0] sm:$0xff]
        %v1014 = vld [vmem:[#allocation7 + $0xb8] sm:$0xff]
        %v1015 = vld [vmem:[#allocation7 + $0xc0] sm:$0xff]
        %v1016 = vld [vmem:[#allocation7 + $0xc8] sm:$0xff]
        %v1017 = vld [vmem:[#allocation7 + $0xd0] sm:$0xff]
        %v1018 = vld [vmem:[#allocation7 + $0xd8] sm:$0xff]
        %v1019 = vld [vmem:[#allocation7 + $0xe0] sm:$0xff]
        %v1020 = vld [vmem:[#allocation7 + $0xe8] sm:$0xff]
        %v1021 = vld [vmem:[#allocation7 + $0xf0] sm:$0xff]
        %v1022 = vld [vmem:[#allocation7 + $0xf8] sm:$0xff]
        %v1023 = vld [vmem:[#allocation7 + $0x100] sm:$0xff]
        %v1024 = vld [vmem:[#allocation7 + $0x108] sm:$0xff]
        %v1025 = vld [vmem:[#allocation7 + $0x110] sm:$0xff]
        %v1026 = vld [vmem:[#allocation7 + $0x118] sm:$0xff]
        %v1027 = vld [vmem:[#allocation7 + $0x120] sm:$0xff]
        %v1028 = vld [vmem:[#allocation7 + $0x128] sm:$0xff]
        %v1029 = vld [vmem:[#allocation7 + $0x130] sm:$0xff]
        %v1030 = vld [vmem:[#allocation7 + $0x138] sm:$0xff]
        %v1031 = vld [vmem:[#allocation7 + $0x140] sm:$0xff]
        %v1032 = vld [vmem:[#allocation7 + $0x148] sm:$0xff]
        %v1033 = vld [vmem:[#allocation7 + $0x150] sm:$0xff]
        %v1034 = vld [vmem:[#allocation7 + $0x158] sm:$0xff]
        %v1035 = vld [vmem:[#allocation7 + $0x160] sm:$0xff]
        %v1036 = vld [vmem:[#allocation7 + $0x168] sm:$0xff]
        %v1037 = vld [vmem:[#allocation7 + $0x170] sm:$0xff]
        %v1038 = vld [vmem:[#allocation7 + $0x178] sm:$0xff]
        %v1040 = vlaneseq
        %v1041 = vshrl.u32 %v1040, 7
        %v1042 = vsub.s32 0, %v1041
        %v1043 = vrot.slane %v942, %v1042
        %1045 = vmatprep.subr.mxu0 0.0
        %1046 = vmatpush1.msra.mxu0 %v991
        %1047 = vmatprep.subr.mxu0 0.0
        %1048 = vmatpush1.msra.mxu0 %v992
        %1049 = vmatprep.subr.mxu0 0.0
        %1050 = vmatpush1.msra.mxu0 %v993
        %1051 = vmatprep.subr.mxu0 0.0
        %1052 = vmatpush1.msra.mxu0 %v994
        %1053 = vmatprep.subr.mxu0 0.0
        %1054 = vmatpush1.msra.mxu0 %v995
        %1055 = vmatprep.subr.mxu0 0.0
        %1056 = vmatpush1.msra.mxu0 %v996
        %1057 = vmatprep.subr.mxu0 0.0
        %1058 = vmatpush1.msra.mxu0 %v997
        %1059 = vmatprep.subr.mxu0 0.0
        %1060 = vmatpush1.msra.mxu0 %v998
        %1061 = vmatprep.subr.mxu0 0.0
        %1062 = vmatpush1.msra.mxu0 %v999
        %1063 = vmatprep.subr.mxu0 0.0
        %1064 = vmatpush1.msra.mxu0 %v1000
        %1065 = vmatprep.subr.mxu0 0.0
        %1066 = vmatpush1.msra.mxu0 %v1001
        %1067 = vmatprep.subr.mxu0 0.0
        %1068 = vmatpush1.msra.mxu0 %v1002
        %1069 = vmatprep.subr.mxu0 0.0
        %1070 = vmatpush1.msra.mxu0 %v1003
        %1071 = vmatprep.subr.mxu0 0.0
        %1072 = vmatpush1.msra.mxu0 %v1004
        %1073 = vmatprep.subr.mxu0 0.0
        %1074 = vmatpush1.msra.mxu0 %v1005
        %1075 = vmatprep.subr.mxu0 0.0
        %1076 = vmatpush1.msra.mxu0 %v1006
        %1077 = vmatprep.subr.mxu0 0.0
        %1078 = vmatpush1.msra.mxu0 %v1007
        %1079 = vmatprep.subr.mxu0 0.0
        %1080 = vmatpush1.msra.mxu0 %v1008
        %1081 = vmatprep.subr.mxu0 0.0
        %1082 = vmatpush1.msra.mxu0 %v1009
        %1083 = vmatprep.subr.mxu0 0.0
        %1084 = vmatpush1.msra.mxu0 %v1010
        %1085 = vmatprep.subr.mxu0 0.0
        %1086 = vmatpush1.msra.mxu0 %v1011
        %1087 = vmatprep.subr.mxu0 0.0
        %1088 = vmatpush1.msra.mxu0 %v1012
        %1089 = vmatprep.subr.mxu0 0.0
        %1090 = vmatpush1.msra.mxu0 %v1013
        %1091 = vmatprep.subr.mxu0 0.0
        %1092 = vmatpush1.msra.mxu0 %v1014
        %1093 = vmatprep.subr.mxu0 0.0
        %1094 = vmatpush1.msra.mxu0 %v1015
        %1095 = vmatprep.subr.mxu0 0.0
        %1096 = vmatpush1.msra.mxu0 %v1016
        %1097 = vmatprep.subr.mxu0 0.0
        %1098 = vmatpush1.msra.mxu0 %v1017
        %1099 = vmatprep.subr.mxu0 0.0
        %1100 = vmatpush1.msra.mxu0 %v1018
        %1101 = vmatprep.subr.mxu0 0.0
        %1102 = vmatpush1.msra.mxu0 %v1019
        %1103 = vmatprep.subr.mxu0 0.0
        %1104 = vmatpush1.msra.mxu0 %v1020
        %1105 = vmatprep.subr.mxu0 0.0
        %1106 = vmatpush1.msra.mxu0 %v1021
        %1107 = vmatprep.subr.mxu0 0.0
        %1108 = vmatpush1.msra.mxu0 %v1022
        %1109 = vmatprep.mubr.f32.mxu0 %v772
        %1110 = vmatmul.mubr.f32.gmra.mrb[0].mxu0 %v959
        %v1111 = vpop.f32.mrb[0].mxu0
        %v1112 = vadd.f32 %v1043, %v1111
        %v1113 = vpop.f32.mrb[0].mxu0
        %1114 = vmatprep.mubr.f32.mxu0 %v773
        %1115 = vmatmul.mubr.f32.gmra.mrb[0].mxu0 %v960
        %v1116 = vpop.f32.mrb[0].mxu0
        %v1117 = vadd.f32 %v1043, %v1116
        %v1118 = vpop.f32.mrb[0].mxu0
        %1119 = vmatprep.mubr.f32.mxu0 %v828
        %1120 = vmatmul.mubr.f32.gmra.mrb[0].mxu0 %v961
        %v1121 = vpop.f32.mrb[0].mxu0
        %v1122 = vadd.f32 %v1043, %v1121
        %v1123 = vpop.f32.mrb[0].mxu0
        %1124 = vmatprep.mubr.f32.mxu0 %v829
        %1125 = vmatmul.mubr.f32.gmra.mrb[0].mxu0 %v962
        %v1126 = vpop.f32.mrb[0].mxu0
        %v1127 = vadd.f32 %v1043, %v1126
        %v1128 = vpop.f32.mrb[0].mxu0
        %1129 = vmatprep.mubr.f32.mxu0 %v884
        %1130 = vmatmul.mubr.f32.gmra.mrb[0].mxu0 %v963
        %v1131 = vpop.f32.mrb[0].mxu0
        %v1132 = vadd.f32 %v1043, %v1131
        %v1133 = vpop.f32.mrb[0].mxu0
        %1134 = vmatprep.mubr.f32.mxu0 %v885
        %1135 = vmatmul.mubr.f32.gmra.mrb[0].mxu0 %v964
        %v1136 = vpop.f32.mrb[0].mxu0
        %v1137 = vadd.f32 %v1043, %v1136
        %v1138 = vpop.f32.mrb[0].mxu0
        %1139 = vmatprep.mubr.f32.mxu0 %v940
        %1140 = vmatmul.mubr.f32.gmra.mrb[0].mxu0 %v965
        %v1141 = vpop.f32.mrb[0].mxu0
        %v1142 = vadd.f32 %v1043, %v1141
        %v1143 = vpop.f32.mrb[0].mxu0
        %1144 = vmatprep.mubr.f32.mxu0 %v941
        %1145 = vmatmul.mubr.f32.gmra.mrb[0].mxu0 %v966
        %v1146 = vpop.f32.mrb[0].mxu0
        %v1147 = vadd.f32 %v1043, %v1146
        %v1148 = vpop.f32.mrb[0].mxu0
        %1149 = vdwg.mxu0
        %1150 = vmatprep.subr.mxu0 0.0
        %1151 = vmatpush1.msra.mxu0 %v1023
        %1152 = vmatprep.subr.mxu0 0.0
        %1153 = vmatpush1.msra.mxu0 %v1024
        %1154 = vmatprep.subr.mxu0 0.0
        %1155 = vmatpush1.msra.mxu0 %v1025
        %1156 = vmatprep.subr.mxu0 0.0
        %1157 = vmatpush1.msra.mxu0 %v1026
        %1158 = vmatprep.subr.mxu0 0.0
        %1159 = vmatpush1.msra.mxu0 %v1027
        %1160 = vmatprep.subr.mxu0 0.0
        %1161 = vmatpush1.msra.mxu0 %v1028
        %1162 = vmatprep.subr.mxu0 0.0
        %1163 = vmatpush1.msra.mxu0 %v1029
        %1164 = vmatprep.subr.mxu0 0.0
        %1165 = vmatpush1.msra.mxu0 %v1030
        %1166 = vmatprep.subr.mxu0 0.0
        %1167 = vmatpush1.msra.mxu0 %v1031
        %1168 = vmatprep.subr.mxu0 0.0
        %1169 = vmatpush1.msra.mxu0 %v1032
        %1170 = vmatprep.subr.mxu0 0.0
        %1171 = vmatpush1.msra.mxu0 %v1033
        %1172 = vmatprep.subr.mxu0 0.0
        %1173 = vmatpush1.msra.mxu0 %v1034
        %1174 = vmatprep.subr.mxu0 0.0
        %1175 = vmatpush1.msra.mxu0 %v1035
        %1176 = vmatprep.subr.mxu0 0.0
        %1177 = vmatpush1.msra.mxu0 %v1036
        %1178 = vmatprep.subr.mxu0 0.0
        %1179 = vmatpush1.msra.mxu0 %v1037
        %1180 = vmatprep.subr.mxu0 0.0
        %1181 = vmatpush1.msra.mxu0 %v1038
        %1182 = vmatprep.subr.mxu0 0.0
        %1183 = vmatpush1.msra.mxu0 0.0
        %1184 = vmatprep.subr.mxu0 0.0
        %1185 = vmatpush1.msra.mxu0 0.0
        %1186 = vmatprep.subr.mxu0 0.0
        %1187 = vmatpush1.msra.mxu0 0.0
        %1188 = vmatprep.subr.mxu0 0.0
        %1189 = vmatpush1.msra.mxu0 0.0
        %1190 = vmatprep.subr.mxu0 0.0
        %1191 = vmatpush1.msra.mxu0 0.0
        %1192 = vmatprep.subr.mxu0 0.0
        %1193 = vmatpush1.msra.mxu0 0.0
        %1194 = vmatprep.subr.mxu0 0.0
        %1195 = vmatpush1.msra.mxu0 0.0
        %1196 = vmatprep.subr.mxu0 0.0
        %1197 = vmatpush1.msra.mxu0 0.0
        %1198 = vmatprep.subr.mxu0 0.0
        %1199 = vmatpush1.msra.mxu0 0.0
        %1200 = vmatprep.subr.mxu0 0.0
        %1201 = vmatpush1.msra.mxu0 0.0
        %1202 = vmatprep.subr.mxu0 0.0
        %1203 = vmatpush1.msra.mxu0 0.0
        %1204 = vmatprep.subr.mxu0 0.0
        %1205 = vmatpush1.msra.mxu0 0.0
        %1206 = vmatprep.subr.mxu0 0.0
        %1207 = vmatpush1.msra.mxu0 0.0
        %1208 = vmatprep.subr.mxu0 0.0
        %1209 = vmatpush1.msra.mxu0 0.0
        %1210 = vmatprep.subr.mxu0 0.0
        %1211 = vmatpush1.msra.mxu0 0.0
        %1212 = vmatprep.subr.mxu0 0.0
        %1213 = vmatpush1.msra.mxu0 0.0
        %1214 = vmatprep.mubr.f32.mxu0 0.0
        %1215 = vmatmul.mubr.f32.gmra.mrb[0].mxu0 %v983
        %v1216 = vpop.f32.mrb[0].mxu0
        %v1217 = vadd.f32 %v1112, %v1216
        %v1218 = vpop.f32.mrb[0].mxu0
        %1219 = vmatprep.mubr.f32.mxu0 0.0
        %1220 = vmatmul.mubr.f32.gmra.mrb[0].mxu0 %v984
        %v1221 = vpop.f32.mrb[0].mxu0
        %v1222 = vadd.f32 %v1117, %v1221
        %v1223 = vpop.f32.mrb[0].mxu0
        %1224 = vmatprep.mubr.f32.mxu0 0.0
        %1225 = vmatmul.mubr.f32.gmra.mrb[0].mxu0 %v985
        %v1226 = vpop.f32.mrb[0].mxu0
        %v1227 = vadd.f32 %v1122, %v1226
        %v1228 = vpop.f32.mrb[0].mxu0
        %1229 = vmatprep.mubr.f32.mxu0 0.0
        %1230 = vmatmul.mubr.f32.gmra.mrb[0].mxu0 %v986
        %v1231 = vpop.f32.mrb[0].mxu0
        %v1232 = vadd.f32 %v1127, %v1231
        %v1233 = vpop.f32.mrb[0].mxu0
        %1234 = vmatprep.mubr.f32.mxu0 0.0
        %1235 = vmatmul.mubr.f32.gmra.mrb[0].mxu0 %v987
        %v1236 = vpop.f32.mrb[0].mxu0
        %v1237 = vadd.f32 %v1132, %v1236
        %v1238 = vpop.f32.mrb[0].mxu0
        %1239 = vmatprep.mubr.f32.mxu0 0.0
        %1240 = vmatmul.mubr.f32.gmra.mrb[0].mxu0 %v988
        %v1241 = vpop.f32.mrb[0].mxu0
        %v1242 = vadd.f32 %v1137, %v1241
        %v1243 = vpop.f32.mrb[0].mxu0
        %1244 = vmatprep.mubr.f32.mxu0 0.0
        %1245 = vmatmul.mubr.f32.gmra.mrb[0].mxu0 %v989
        %v1246 = vpop.f32.mrb[0].mxu0
        %v1247 = vadd.f32 %v1142, %v1246
        %v1248 = vpop.f32.mrb[0].mxu0
        %1249 = vmatprep.mubr.f32.mxu0 0.0
        %1250 = vmatmul.mubr.f32.gmra.mrb[0].mxu0 %v990
        %v1251 = vpop.f32.mrb[0].mxu0
        %v1252 = vadd.f32 %v1147, %v1251
        %v1253 = vpop.f32.mrb[0].mxu0
        %1254 = vdwg.mxu0
        %v1255 = vmax.f32 %v1217, 0.0
        %v1256 = vmax.f32 %v1222, 0.0
        %v1257 = vmax.f32 %v1227, 0.0
        %v1258 = vmax.f32 %v1232, 0.0
        %v1259 = vmax.f32 %v1237, 0.0
        %v1260 = vmax.f32 %v1242, 0.0
        %v1261 = vmax.f32 %v1247, 0.0
        %v1262 = vmax.f32 %v1252, 0.0
        %1263 = vst [vmem:[%s271] sm:$0xff] %v1255
        %1264 = vst [vmem:[%s271 + $0x8] sm:$0xff] %v1256
        %1265 = vst [vmem:[%s271 + $0x10] sm:$0xff] %v1257
        %1266 = vst [vmem:[%s271 + $0x18] sm:$0xff] %v1258
        %1267 = vst [vmem:[%s271 + $0x20] sm:$0xff] %v1259
        %1268 = vst [vmem:[%s271 + $0x28] sm:$0xff] %v1260
        %1269 = vst [vmem:[%s271 + $0x30] sm:$0xff] %v1261
        %1270 = vst [vmem:[%s271 + $0x38] sm:$0xff] %v1262
        %s1271 = sand.u32 %s141, 1
        %s1272 = scalar_lea.sflag [#allocation4], %s1271
        %s1273 = sand.u32 %s141, 1
        %s1274 = smul.addr %s1273, 64
        %s1275 = scalar_lea.vmem [#allocation8], %s1274
        // Predicated region
        $region53: #{tpu_custom_call.1} parent=39 // pred_check
          %p1276 = pneg %p151
        $region54: #{tpu_custom_call.1} parent=39 // pred_check_branch
          %1278 = sbr.rel (%p1276) target = $region56
        $region55: #{tpu_custom_call.1} parent=39 // pred_region
          %s1279 = smul.u32 8, %s23
          %s1281 = ssub.s32 1024, 1024
          %1282 = vsyncadd %s1272, %s1281
          %s1283 = smul.addr %s1279, 128
          %s1284 = scalar_lea.hbm %s5, %s1283
          %s1285 = sshll.u32 %s1275, 4
          %s1286 = int_to_ptr.vmem [resolvable:$true] %s1285
          %1291 = dma.vmem_to_hbm [thread:$0]  %s1286, 1024, %s1284, %s1272, 128, 128, 8
        $region56: #{tpu_custom_call.1} parent=39 // pred_fallthru
          _
      $region40: #{tpu_custom_call.1} parent=5 // pred_fallthru
        _
      %p1292 = scmp.le.s32.totalorder 2, %s18
      // Predicated region
      $region57: #{tpu_custom_call.1} parent=5 // pred_check
        %p1293 = pneg %p1292
      $region58: #{tpu_custom_call.1} parent=5 // pred_check_branch
        %1295 = sbr.rel (%p1293) target = $region60
      $region59: #{tpu_custom_call.1} parent=5 // pred_region
        %s1296 = ssub.s32 %s18, 2
        // Predicated region
        $region61: #{tpu_custom_call.1} parent=59 // pred_check
          %p1297 = pneg %p157
        $region62: #{tpu_custom_call.1} parent=59 // pred_check_branch
          %1299 = sbr.rel (%p1297) target = $region64
        $region63: #{tpu_custom_call.1} parent=59 // pred_region
          %s1300 = sand.u32 %s142, 1
          %s1301 = scalar_lea.sflag [#allocation4], %s1300
          %s1302 = sand.u32 %s142, 1
          %s1303 = smul.addr %s1302, 64
          %s1304 = scalar_lea.vmem [#allocation8], %s1303
          %1305 = dma.done %s1301, 1024
        $region64: #{tpu_custom_call.1} parent=59 // pred_fallthru
          _
      $region60: #{tpu_custom_call.1} parent=5 // pred_fallthru
        _
    $region6: #{tpu_custom_call.1} parent=1 // loop_footer
      %s22 = sadd.s32 1, %s18
    $region7: #{tpu_custom_call.1} parent=1 // loop_footer_branch
      %17 = sbr.rel target = $region3
    $region8: #{tpu_custom_call.1} parent=1 // loop_exit
      _
    %1306 = vsyncpa [#allocation3], 1
    %s1307 = scalar_lea.sflag [#allocation3], 1
    %1308 = vsyncpa %s1307, 1
    %1309 = vsyncpa [#allocation6], 1
    %1310 = vsyncpa [#allocation4], 1
    %s1311 = scalar_lea.sflag [#allocation4], 1
    %1312 = vsyncpa %s1311, 1

</llo_original>
